<compile_context>
chip_gen: v5e
topology: v5e:2x2
jax: 0.10.0
libtpu: 0.0.40
codegen_flags: <defaults>
</compile_context>

<pallas_src>
import math
import functools

import numpy as np
import jax
import jax.numpy as jnp
from jax.experimental import pallas as pl
from jax.experimental.pallas import tpu as pltpu

EPS = 1e-5          # ModelArgs.norm_eps
NEG_INF = -1e30     # causal-mask fill / running-max init


def _rmsnorm(x, w):
    ms = jnp.mean(x * x, axis=-1, keepdims=True)
    return x * jax.lax.rsqrt(ms + EPS) * w


def _rotate_pairs(t):
    """Interleaved-pair rotation: out[2i] = -t[2i+1], out[2i+1] = t[2i].

    Two XLU lane rolls + one VPU select (no (D, D) matmul, no extra weights).
    """
    _, D = t.shape
    lane = jax.lax.broadcasted_iota(jnp.int32, t.shape, 1)
    is_even = (lane & 1) == 0
    right = pltpu.roll(t, shift=D - 1, axis=1)   # right[j] = t[j+1]
    left = pltpu.roll(t, shift=1, axis=1)        # left[j]  = t[j-1]
    return jnp.where(is_even, -right, left)


def _pick_tile(n, target, align):
    """Largest t <= target with n % t == 0 and t % align == 0, else n (full dim)."""
    for t in range(min(target, n), align - 1, -1):
        if n % t == 0 and t % align == 0:
            return t
    return n


# ---------------------------------------------------------------------------
# Kernel 1: RMSNorm + QKV + RoPE + flash (online-softmax) causal attention
#           + wo projection + residual
# grid = (batch, num_query_tiles)
# ---------------------------------------------------------------------------
def _attn_kernel(x_ref, nw_ref, wq_ref, wkv_ref, wo_ref, cos_ref, sin_ref,
                 o_ref, k_scr, v_scr, attn_scr, *, n_heads, head_dim, q_tile):
    qi = pl.program_id(1)
    S, D = k_scr.shape
    TQ = q_tile
    q_start = pl.multiple_of(qi * TQ, TQ)

    # ---- once per batch element: RMSNorm(x) -> K,V projection -> RoPE(K) -> scratch
    @pl.when(qi == 0)
    def _():
        xf = x_ref[0]                                        # (S, D) f32
        xn = _rmsnorm(xf, nw_ref[0]).astype(jnp.bfloat16)
        kv = jnp.dot(xn, wkv_ref[...],
                     preferred_element_type=jnp.float32)     # (S, 2D)
        k = kv[:, :D]
        v = kv[:, D:]
        k = k * cos_ref[...] + _rotate_pairs(k) * sin_ref[...]
        k_scr[...] = k.astype(jnp.bfloat16)
        v_scr[...] = v.astype(jnp.bfloat16)

    # ---- per query tile: RMSNorm -> Q projection (1/sqrt(hd) pre-folded into wq) -> RoPE
    xq = x_ref[0, pl.ds(q_start, TQ), :]                     # (TQ, D) f32 residual rows
    qn = _rmsnorm(xq, nw_ref[0]).astype(jnp.bfloat16)
    q = jnp.dot(qn, wq_ref[...], preferred_element_type=jnp.float32)
    cos_q = cos_ref[pl.ds(q_start, TQ), :]
    sin_q = sin_ref[pl.ds(q_start, TQ), :]
    q = q * cos_q + _rotate_pairs(q) * sin_q
    qb = q.astype(jnp.bfloat16)

    # causal tile skipping: KV tiles strictly above the diagonal are never visited
    num_kv_tiles = qi + 1

    # flash-style online softmax, one head at a time (only one head's (TQ, TKV)
    # scores + (TQ, hd) accumulator are live -> low vreg / VMEM pressure)
    for h in range(n_heads):
        hs = pl.ds(h * head_dim, head_dim)
        qh = qb[:, h * head_dim:(h + 1) * head_dim]          # (TQ, hd) bf16

        def kv_step(t, carry, qh=qh, hs=hs):
            m, l, acc = carry
            ks = pl.multiple_of(t * TQ, TQ)
            kt = k_scr[pl.ds(ks, TQ), hs]                    # (TQ, hd) bf16
            vt = v_scr[pl.ds(ks, TQ), hs]
            s = jax.lax.dot_general(qh, kt, (((1,), (1,)), ((), ())),
                                    preferred_element_type=jnp.float32)  # (TQ, TQ)
            col = ks + jax.lax.broadcasted_iota(jnp.int32, s.shape, 1)
            row = q_start + jax.lax.broadcasted_iota(jnp.int32, s.shape, 0)
            s = jnp.where(col <= row, s, NEG_INF)
            m_new = jnp.maximum(m, jnp.max(s, axis=-1, keepdims=True))
            alpha = jnp.exp(m - m_new)
            p = jnp.exp(s - m_new)
            l_new = alpha * l + jnp.sum(p, axis=-1, keepdims=True)
            acc_new = alpha * acc + jnp.dot(p.astype(jnp.bfloat16), vt,
                                            preferred_element_type=jnp.float32)
            return m_new, l_new, acc_new

        m0 = jnp.full((TQ, 1), NEG_INF, jnp.float32)
        l0 = jnp.zeros((TQ, 1), jnp.float32)
        a0 = jnp.zeros((TQ, head_dim), jnp.float32)
        _, l, acc = jax.lax.fori_loop(0, num_kv_tiles, kv_step, (m0, l0, a0))

        # per-head result straight into the (TQ, D) scratch slice (no concatenate)
        attn_scr[:, hs] = (acc * pl.reciprocal(l, approx=True)).astype(jnp.bfloat16)

    # fused output projection + residual (lane-dense (TQ, D) store)
    o_ref[0] = xq + jnp.dot(attn_scr[...], wo_ref[...],
                            preferred_element_type=jnp.float32)


def attention_block(x, norm_w, wq_b, wkv_b, wo_b, cos_d, sin_d, *,
                    n_heads, q_tile_target=256):
    B, S, D = x.shape
    hd = D // n_heads
    TQ = _pick_tile(S, q_tile_target, 8)
    nq = S // TQ
    kernel = functools.partial(_attn_kernel, n_heads=n_heads, head_dim=hd, q_tile=TQ)
    # NOTE: the query-tile axis is "arbitrary" because K/V are computed at qi == 0
    # and reused from VMEM scratch for every later query tile of the same batch
    # element; the batch axis stays "parallel" for megacore sharding.
    return pl.pallas_call(
        kernel,
        out_shape=jax.ShapeDtypeStruct((B, S, D), jnp.float32),
        grid_spec=pltpu.PrefetchScalarGridSpec(
            num_scalar_prefetch=0,
            grid=(B, nq),
            in_specs=[
                pl.BlockSpec((1, S, D), lambda b, q: (b, 0, 0)),     # x (full seq)
                pl.BlockSpec((1, D), lambda b, q: (0, 0)),           # attn_norm
                pl.BlockSpec((D, D), lambda b, q: (0, 0)),           # wq (pre-scaled)
                pl.BlockSpec((D, 2 * D), lambda b, q: (0, 0)),       # wk|wv fused
                pl.BlockSpec((D, D), lambda b, q: (0, 0)),           # wo
                pl.BlockSpec((S, D), lambda b, q: (0, 0)),           # cos (pre-tiled)
                pl.BlockSpec((S, D), lambda b, q: (0, 0)),           # sin (pre-tiled)
            ],
            out_specs=pl.BlockSpec((1, TQ, D), lambda b, q: (b, q, 0)),
            scratch_shapes=[
                pltpu.VMEM((S, D), jnp.bfloat16),    # K (RoPE'd), per batch element
                pltpu.VMEM((S, D), jnp.bfloat16),    # V
                pltpu.VMEM((TQ, D), jnp.bfloat16),   # per-tile attention output
            ],
        ),
        # TODO(synk): alias x with the output (input_output_aliases={0: 0}) when the
        # caller donates x; without donation XLA would insert an extra copy of x.
        compiler_params=pltpu.CompilerParams(
            dimension_semantics=("parallel", "arbitrary"),
            vmem_limit_bytes=64 * 1024 * 1024,
        ),
    )(x, norm_w, wq_b, wkv_b, wo_b, cos_d, sin_d)


# ---------------------------------------------------------------------------
# Kernel 2: RMSNorm + SwiGLU FeedForward + residual, hidden dim tiled on a
#           reduction grid axis with an f32 VMEM accumulator.
# grid = (batch, num_seq_tiles, num_hidden_tiles)
# ---------------------------------------------------------------------------
def _ffn_kernel(h_ref, nw_ref, w1_ref, w3_ref, w2_ref, o_ref, hn_scr, acc_scr):
    f = pl.program_id(2)

    @pl.when(f == 0)
    def _():
        hn_scr[...] = _rmsnorm(h_ref[0], nw_ref[0]).astype(jnp.bfloat16)
        acc_scr[...] = jnp.zeros_like(acc_scr)

    hn = hn_scr[...]                                          # (TS, D) bf16
    a = jnp.dot(hn, w1_ref[...], preferred_element_type=jnp.float32)   # (TS, TF)
    b = jnp.dot(hn, w3_ref[...], preferred_element_type=jnp.float32)
    g = (a * jax.nn.sigmoid(a)) * b                           # SiLU gate, f32 VPU
    acc_scr[...] += jnp.dot(g.astype(jnp.bfloat16), w2_ref[...],
                            preferred_element_type=jnp.float32)

    @pl.when(f == pl.num_programs(2) - 1)
    def _():
        o_ref[0] = h_ref[0] + acc_scr[...]


def ffn_block(h, norm_w, w1_b, w3_b, w2_b, *, seq_tile_target=256,
              hidden_tile_target=512):
    B, S, D = h.shape
    Hd = w2_b.shape[0]
    TS = _pick_tile(S, seq_tile_target, 8)
    TF = _pick_tile(Hd, hidden_tile_target, 128)
    return pl.pallas_call(
        _ffn_kernel,
        out_shape=jax.ShapeDtypeStruct((B, S, D), jnp.float32),
        grid_spec=pltpu.PrefetchScalarGridSpec(
            num_scalar_prefetch=0,
            grid=(B, S // TS, Hd // TF),
            in_specs=[
                pl.BlockSpec((1, TS, D), lambda b, s, f: (b, s, 0)),
                pl.BlockSpec((1, D), lambda b, s, f: (0, 0)),
                pl.BlockSpec((D, TF), lambda b, s, f: (0, f)),     # w1 tile
                pl.BlockSpec((D, TF), lambda b, s, f: (0, f)),     # w3 tile
                pl.BlockSpec((TF, D), lambda b, s, f: (f, 0)),     # w2 tile
            ],
            out_specs=pl.BlockSpec((1, TS, D), lambda b, s, f: (b, s, 0)),
            scratch_shapes=[
                pltpu.VMEM((TS, D), jnp.bfloat16),   # cached RMSNorm(h) tile
                pltpu.VMEM((TS, D), jnp.float32),    # FFN accumulator
            ],
        ),
        input_output_aliases={0: 0},                 # residual stream reuses its buffer
        compiler_params=pltpu.CompilerParams(
            dimension_semantics=("parallel", "parallel", "arbitrary"),
            vmem_limit_bytes=64 * 1024 * 1024,
        ),
    )(h, norm_w, w1_b, w3_b, w2_b)


# ---------------------------------------------------------------------------
# One-time parameter / RoPE-table preparation (hoisted out of the forward pass)
# ---------------------------------------------------------------------------
def prepare_params(params, n_heads):
    D = params["wq"].shape[0]
    hd = D // n_heads
    scale = 1.0 / math.sqrt(hd)
    return {
        "wq": (params["wq"] * scale).astype(jnp.bfloat16),   # 1/sqrt(hd) folded in
        "wkv": jnp.concatenate([params["wk"], params["wv"]],
                               axis=1).astype(jnp.bfloat16),
        "wo": params["wo"].astype(jnp.bfloat16),
        "w1": params["w1"].astype(jnp.bfloat16),
        "w3": params["w3"].astype(jnp.bfloat16),
        "w2": params["w2"].astype(jnp.bfloat16),
        "attn_norm": params["attn_norm"].reshape(1, D),
        "ffn_norm": params["ffn_norm"].reshape(1, D),
    }


def prepare_rope(cos, sin, n_heads):
    # interleaved-pair tables broadcast to the full model dim: (S, hd//2) -> (S, D)
    cos_hd = jnp.repeat(cos, 2, axis=-1)
    sin_hd = jnp.repeat(sin, 2, axis=-1)
    return jnp.tile(cos_hd, (1, n_heads)), jnp.tile(sin_hd, (1, n_heads))


# ---------------------------------------------------------------------------
# Full TransformerBlock forward (adapter=None, video_start=None path)
# ---------------------------------------------------------------------------
@functools.partial(jax.jit,
                   static_argnames=("n_heads", "q_tile", "seq_tile", "hidden_tile"))
def transformer_block(x, prepped, cos_d, sin_d, *, n_heads,
                      q_tile=256, seq_tile=256, hidden_tile=512):
    h = attention_block(x, prepped["attn_norm"], prepped["wq"], prepped["wkv"],
                        prepped["wo"], cos_d, sin_d,
                        n_heads=n_heads, q_tile_target=q_tile)
    out = ffn_block(h, prepped["ffn_norm"], prepped["w1"], prepped["w3"],
                    prepped["w2"], seq_tile_target=seq_tile,
                    hidden_tile_target=hidden_tile)
    return out


# ---------------------------------------------------------------------------
# Pure-JAX reference mirroring the PyTorch forward semantics
# ---------------------------------------------------------------------------
def reference_block(x, params, cos, sin, mask, n_heads):
    def rmsnorm(t, w):
        ms = jnp.mean(t.astype(jnp.float32) ** 2, axis=-1, keepdims=True)
        return (t.astype(jnp.float32) * jax.lax.rsqrt(ms + EPS)).astype(t.dtype) * w

    B, S, D = x.shape
    H = n_heads
    hd = D // H

    xn = rmsnorm(x, params["attn_norm"])
    q = (xn @ params["wq"]).reshape(B, S, H, hd)
    k = (xn @ params["wk"]).reshape(B, S, H, hd)
    v = (xn @ params["wv"]).reshape(B, S, H, hd)

    def rope(t):  # complex multiply on interleaved pairs (apply_rotary_emb)
        tr = t.reshape(B, S, H, hd // 2, 2)
        a, b = tr[..., 0], tr[..., 1]
        c = cos[None, :, None, :]
        s = sin[None, :, None, :]
        return jnp.stack([a * c - b * s, a * s + b * c], axis=-1).reshape(B, S, H, hd)

    q, k = rope(q), rope(k)
    qh, kh, vh = (t.transpose(0, 2, 1, 3) for t in (q, k, v))
    scores = jnp.einsum("bhqd,bhkd->bhqk", qh, kh) / math.sqrt(hd) + mask[None, None]
    probs = jax.nn.softmax(scores.astype(jnp.float32), axis=-1)
    out = jnp.einsum("bhqk,bhkd->bhqd", probs, vh)
    out = out.transpose(0, 2, 1, 3).reshape(B, S, D)
    h = x + out @ params["wo"]
    hn = rmsnorm(h, params["ffn_norm"])
    ff = (jax.nn.silu(hn @ params["w1"]) * (hn @ params["w3"])) @ params["w2"]
    return h + ff


if __name__ == "__main__":
    def run_case(B, S, D, H, q_tile, seq_tile, key):
        hd = D // H
        multiple_of = 32
        hidden = int(2 * (4 * D) / 3)
        hidden = multiple_of * ((hidden + multiple_of - 1) // multiple_of)

        ks = jax.random.split(key, 8)
        wscale = 0.05
        params = {
            "wq": jax.random.normal(ks[0], (D, D), jnp.float32) * wscale,
            "wk": jax.random.normal(ks[1], (D, D), jnp.float32) * wscale,
            "wv": jax.random.normal(ks[2], (D, D), jnp.float32) * wscale,
            "wo": jax.random.normal(ks[3], (D, D), jnp.float32) * wscale,
            "w1": jax.random.normal(ks[4], (D, hidden), jnp.float32) * wscale,
            "w2": jax.random.normal(ks[5], (hidden, D), jnp.float32) * wscale,
            "w3": jax.random.normal(ks[6], (D, hidden), jnp.float32) * wscale,
            "attn_norm": jnp.ones((D,), jnp.float32),   # RMSNorm init = ones
            "ffn_norm": jnp.ones((D,), jnp.float32),
        }
        x = jax.random.normal(ks[7], (B, S, D), jnp.float32)

        # freqs_cis (precompute_freqs_cis) as cos/sin of shape (S, head_dim//2)
        freqs = 1.0 / (10000.0 ** (jnp.arange(0, hd, 2, dtype=jnp.float32) / hd))
        angles = jnp.outer(jnp.arange(S, dtype=jnp.float32), freqs)
        cos, sin = jnp.cos(angles), jnp.sin(angles)

        prepped = prepare_params(params, H)              # one-time weight prep
        cos_d, sin_d = prepare_rope(cos, sin, H)         # one-time RoPE table prep

        out = transformer_block(x, prepped, cos_d, sin_d, n_heads=H,
                                q_tile=q_tile, seq_tile=seq_tile)
        out = jax.block_until_ready(out)

        mask = jnp.triu(jnp.full((S, S), NEG_INF, jnp.float32), k=1)
        ref = reference_block(x, params, cos, sin, mask, H)
        np.testing.assert_allclose(np.asarray(out), np.asarray(ref),
                                   rtol=2e-2, atol=2e-2)

    key = jax.random.PRNGKey(0)
    k1, k2 = jax.random.split(key)
    # small single-tile config
    run_case(B=2, S=8, D=32, H=4, q_tile=256, seq_tile=256, key=k1)
    # multi-tile config: exercises the flash KV loop, causal tile skipping and
    # reuse of the per-batch K/V VMEM scratch across query tiles
    run_case(B=2, S=32, D=32, H=4, q_tile=8, seq_tile=8, key=k2)

    print("KERNEL_OK")
</pallas_src>

<mosaic_0001>
module attributes {stable_mosaic.version = 11 : i64} {
  func.func @_ffn_kernel(%arg0: i32, %arg1: i32, %arg2: i32, %arg3: memref<1x8x32xf32, #tpu.memory_space<vmem>>, %arg4: memref<1x32xf32, #tpu.memory_space<vmem>>, %arg5: memref<32x96xbf16, #tpu.memory_space<vmem>>, %arg6: memref<32x96xbf16, #tpu.memory_space<vmem>>, %arg7: memref<96x32xbf16, #tpu.memory_space<vmem>>, %arg8: memref<1x8x32xf32, #tpu.memory_space<vmem>>, %arg9: memref<8x32xbf16, #tpu.memory_space<vmem>>, %arg10: memref<8x32xf32, #tpu.memory_space<vmem>>) attributes {dimension_semantics = [#tpu.dimension_semantics<parallel>, #tpu.dimension_semantics<parallel>, #tpu.dimension_semantics<arbitrary>], iteration_bounds = array<i64: 2, 1, 1>, scalar_prefetch = 0 : i64, scratch_operands = 2 : i64, tpu.core_type = #tpu.core_type<tc>, window_params = [{transform_indices = @transform_0, window_bounds = array<i64: 1, 8, 32>}, {pipeline_mode = #tpu.pipeline_mode<synchronous>, transform_indices = @transform_1, window_bounds = array<i64: 1, 32>}, {transform_indices = @transform_2, window_bounds = array<i64: 32, 96>}, {transform_indices = @transform_3, window_bounds = array<i64: 32, 96>}, {transform_indices = @transform_4, window_bounds = array<i64: 96, 32>}, {transform_indices = @transform_5, window_bounds = array<i64: 1, 8, 32>}]} {
    %c0_i32 = arith.constant 0 : i32
    %0 = arith.cmpi eq, %arg2, %c0_i32 : i32
    %1 = arith.extui %0 : i1 to i32
    %c0_i32_0 = arith.constant 0 : i32
    %2 = arith.cmpi ne, %1, %c0_i32_0 : i32
    scf.if %2 {
      %c0_17 = arith.constant 0 : index
      %c0_18 = arith.constant 0 : index
      %c0_19 = arith.constant 0 : index
      %24 = vector.load %arg3[%c0_17, %c0_18, %c0_19] : memref<1x8x32xf32, #tpu.memory_space<vmem>>, vector<1x8x32xf32>
      %25 = vector.shape_cast %24 : vector<1x8x32xf32> to vector<8x32xf32>
      %c0_20 = arith.constant 0 : index
      %c0_21 = arith.constant 0 : index
      %26 = vector.load %arg4[%c0_20, %c0_21] : memref<1x32xf32, #tpu.memory_space<vmem>>, vector<1x32xf32>
      %27 = vector.shape_cast %26 : vector<1x32xf32> to vector<32xf32>
      %28 = arith.mulf %25, %25 : vector<8x32xf32>
      %cst_22 = arith.constant dense<0.000000e+00> : vector<8xf32>
      %29 = vector.multi_reduction <add>, %28, %cst_22 [1] : vector<8x32xf32> to vector<8xf32>
      %30 = vector.shape_cast %29 : vector<8xf32> to vector<8x1xf32>
      %cst_23 = arith.constant 3.200000e+01 : f32
      %31 = vector.broadcast %cst_23 : f32 to vector<8x1xf32>
      %32 = arith.divf %30, %31 : vector<8x1xf32>
      %cst_24 = arith.constant 9.99999974E-6 : f32
      %33 = vector.broadcast %cst_24 : f32 to vector<8x1xf32>
      %34 = arith.addf %32, %33 : vector<8x1xf32>
      %35 = math.rsqrt %34 : vector<8x1xf32>
      %36 = vector.broadcast %35 : vector<8x1xf32> to vector<8x32xf32>
      %37 = arith.mulf %25, %36 : vector<8x32xf32>
      %38 = vector.shape_cast %27 : vector<32xf32> to vector<1x32xf32>
      %39 = vector.broadcast %38 : vector<1x32xf32> to vector<8x32xf32>
      %40 = arith.mulf %37, %39 : vector<8x32xf32>
      %41 = arith.truncf %40 : vector<8x32xf32> to vector<8x32xbf16>
      %c0_25 = arith.constant 0 : index
      %c0_26 = arith.constant 0 : index
      %42 = vector.load %arg9[%c0_25, %c0_26] : memref<8x32xbf16, #tpu.memory_space<vmem>>, vector<8x32xbf16>
      tpu.vector_store %arg9[%c0_25, %c0_26], %41 {strides = array<i32>} : memref<8x32xbf16, #tpu.memory_space<vmem>>, vector<8x32xbf16>,
      %cst_27 = arith.constant 0.000000e+00 : f32
      %43 = vector.broadcast %cst_27 : f32 to vector<8x32xf32>
      %c0_28 = arith.constant 0 : index
      %c0_29 = arith.constant 0 : index
      %44 = vector.load %arg10[%c0_28, %c0_29] : memref<8x32xf32, #tpu.memory_space<vmem>>, vector<8x32xf32>
      tpu.vector_store %arg10[%c0_28, %c0_29], %43 {strides = array<i32>} : memref<8x32xf32, #tpu.memory_space<vmem>>, vector<8x32xf32>,
    } else {
    }
    %c0 = arith.constant 0 : index
    %c0_1 = arith.constant 0 : index
    %3 = vector.load %arg9[%c0, %c0_1] : memref<8x32xbf16, #tpu.memory_space<vmem>>, vector<8x32xbf16>
    %c0_2 = arith.constant 0 : index
    %c0_3 = arith.constant 0 : index
    %4 = vector.load %arg5[%c0_2, %c0_3] : memref<32x96xbf16, #tpu.memory_space<vmem>>, vector<32x96xbf16>
    %cst = arith.constant dense<0.000000e+00> : vector<8x96xf32>
    %5 = tpu.matmul %3, %4, %cst {dimension_numbers = #tpu.dot_dimension_numbers<[1], [0], [0], [1], [0, 0, 1, 1], [], []>} : vector<8x32xbf16>, vector<32x96xbf16>, vector<8x96xf32> -> vector<8x96xf32>
    %c0_4 = arith.constant 0 : index
    %c0_5 = arith.constant 0 : index
    %6 = vector.load %arg6[%c0_4, %c0_5] : memref<32x96xbf16, #tpu.memory_space<vmem>>, vector<32x96xbf16>
    %cst_6 = arith.constant dense<0.000000e+00> : vector<8x96xf32>
    %7 = tpu.matmul %3, %6, %cst_6 {dimension_numbers = #tpu.dot_dimension_numbers<[1], [0], [0], [1], [0, 0, 1, 1], [], []>} : vector<8x32xbf16>, vector<32x96xbf16>, vector<8x96xf32> -> vector<8x96xf32>
    %8 = arith.negf %5 : vector<8x96xf32>
    %9 = math.exp %8 : vector<8x96xf32>
    %cst_7 = arith.constant 1.000000e+00 : f32
    %10 = vector.broadcast %cst_7 : f32 to vector<8x96xf32>
    %11 = arith.addf %10, %9 : vector<8x96xf32>
    %12 = arith.divf %10, %11 : vector<8x96xf32>
    %13 = arith.mulf %5, %12 : vector<8x96xf32>
    %14 = arith.mulf %13, %7 : vector<8x96xf32>
    %c0_8 = arith.constant 0 : index
    %c0_9 = arith.constant 0 : index
    %15 = vector.load %arg10[%c0_8, %c0_9] : memref<8x32xf32, #tpu.memory_space<vmem>>, vector<8x32xf32>
    %16 = arith.truncf %14 : vector<8x96xf32> to vector<8x96xbf16>
    %c0_10 = arith.constant 0 : index
    %c0_11 = arith.constant 0 : index
    %17 = vector.load %arg7[%c0_10, %c0_11] : memref<96x32xbf16, #tpu.memory_space<vmem>>, vector<96x32xbf16>
    %cst_12 = arith.constant dense<0.000000e+00> : vector<8x32xf32>
    %18 = tpu.matmul %16, %17, %cst_12 {dimension_numbers = #tpu.dot_dimension_numbers<[1], [0], [0], [1], [0, 0, 1, 1], [], []>} : vector<8x96xbf16>, vector<96x32xbf16>, vector<8x32xf32> -> vector<8x32xf32>
    %19 = arith.addf %15, %18 : vector<8x32xf32>
    %c0_13 = arith.constant 0 : index
    %c0_14 = arith.constant 0 : index
    %20 = vector.load %arg10[%c0_13, %c0_14] : memref<8x32xf32, #tpu.memory_space<vmem>>, vector<8x32xf32>
    tpu.vector_store %arg10[%c0_13, %c0_14], %19 {strides = array<i32>} : memref<8x32xf32, #tpu.memory_space<vmem>>, vector<8x32xf32>,
    %c0_i32_15 = arith.constant 0 : i32
    %21 = arith.cmpi eq, %arg2, %c0_i32_15 : i32
    %22 = arith.extui %21 : i1 to i32
    %c0_i32_16 = arith.constant 0 : i32
    %23 = arith.cmpi ne, %22, %c0_i32_16 : i32
    scf.if %23 {
      %c0_17 = arith.constant 0 : index
      %c0_18 = arith.constant 0 : index
      %c0_19 = arith.constant 0 : index
      %24 = vector.load %arg3[%c0_17, %c0_18, %c0_19] : memref<1x8x32xf32, #tpu.memory_space<vmem>>, vector<1x8x32xf32>
      %25 = vector.shape_cast %24 : vector<1x8x32xf32> to vector<8x32xf32>
      %c0_20 = arith.constant 0 : index
      %c0_21 = arith.constant 0 : index
      %26 = vector.load %arg10[%c0_20, %c0_21] : memref<8x32xf32, #tpu.memory_space<vmem>>, vector<8x32xf32>
      %27 = arith.addf %25, %26 : vector<8x32xf32>
      %c0_22 = arith.constant 0 : index
      %c0_23 = arith.constant 0 : index
      %c0_24 = arith.constant 0 : index
      %28 = vector.load %arg8[%c0_22, %c0_23, %c0_24] : memref<1x8x32xf32, #tpu.memory_space<vmem>>, vector<1x8x32xf32>
      %29 = vector.shape_cast %28 : vector<1x8x32xf32> to vector<8x32xf32>
      %30 = vector.shape_cast %27 : vector<8x32xf32> to vector<1x8x32xf32>
      tpu.vector_store %arg8[%c0_22, %c0_23, %c0_24], %30 {strides = array<i32>} : memref<1x8x32xf32, #tpu.memory_space<vmem>>, vector<1x8x32xf32>,
    } else {
    }
    return
  }
  func.func @transform_0(%arg0: i32, %arg1: i32, %arg2: i32) -> (i32, i32, i32) {
    %c0_i32 = arith.constant 0 : i32
    %c0_i32_0 = arith.constant 0 : i32
    return %arg0, %arg1, %c0_i32 : i32, i32, i32
  }
  func.func @transform_1(%arg0: i32, %arg1: i32, %arg2: i32) -> (i32, i32) {
    %c0_i32 = arith.constant 0 : i32
    %c0_i32_0 = arith.constant 0 : i32
    %c0_i32_1 = arith.constant 0 : i32
    return %c0_i32, %c0_i32_0 : i32, i32
  }
  func.func @transform_2(%arg0: i32, %arg1: i32, %arg2: i32) -> (i32, i32) {
    %c0_i32 = arith.constant 0 : i32
    %c0_i32_0 = arith.constant 0 : i32
    return %c0_i32, %arg2 : i32, i32
  }
  func.func @transform_3(%arg0: i32, %arg1: i32, %arg2: i32) -> (i32, i32) {
    %c0_i32 = arith.constant 0 : i32
    %c0_i32_0 = arith.constant 0 : i32
    return %c0_i32, %arg2 : i32, i32
  }
  func.func @transform_4(%arg0: i32, %arg1: i32, %arg2: i32) -> (i32, i32) {
    %c0_i32 = arith.constant 0 : i32
    %c0_i32_0 = arith.constant 0 : i32
    return %arg2, %c0_i32 : i32, i32
  }
  func.func @transform_5(%arg0: i32, %arg1: i32, %arg2: i32) -> (i32, i32, i32) {
    %c0_i32 = arith.constant 0 : i32
    %c0_i32_0 = arith.constant 0 : i32
    return %arg0, %arg1, %c0_i32 : i32, i32, i32
  }
}

module attributes {stable_mosaic.version = 11 : i64} {
  func.func @_attn_kernel(%arg0: i32, %arg1: i32, %arg2: memref<1x8x32xf32, #tpu.memory_space<vmem>>, %arg3: memref<1x32xf32, #tpu.memory_space<vmem>>, %arg4: memref<32x32xbf16, #tpu.memory_space<vmem>>, %arg5: memref<32x64xbf16, #tpu.memory_space<vmem>>, %arg6: memref<32x32xbf16, #tpu.memory_space<vmem>>, %arg7: memref<8x32xf32, #tpu.memory_space<vmem>>, %arg8: memref<8x32xf32, #tpu.memory_space<vmem>>, %arg9: memref<1x8x32xf32, #tpu.memory_space<vmem>>, %arg10: memref<8x32xbf16, #tpu.memory_space<vmem>>, %arg11: memref<8x32xbf16, #tpu.memory_space<vmem>>, %arg12: memref<8x32xbf16, #tpu.memory_space<vmem>>) attributes {dimension_semantics = [#tpu.dimension_semantics<parallel>, #tpu.dimension_semantics<arbitrary>], iteration_bounds = array<i64: 2, 1>, scalar_prefetch = 0 : i64, scratch_operands = 3 : i64, tpu.core_type = #tpu.core_type<tc>, window_params = [{transform_indices = @transform_0, window_bounds = array<i64: 1, 8, 32>}, {pipeline_mode = #tpu.pipeline_mode<synchronous>, transform_indices = @transform_1, window_bounds = array<i64: 1, 32>}, {pipeline_mode = #tpu.pipeline_mode<synchronous>, transform_indices = @transform_2, window_bounds = array<i64: 32, 32>}, {pipeline_mode = #tpu.pipeline_mode<synchronous>, transform_indices = @transform_3, window_bounds = array<i64: 32, 64>}, {pipeline_mode = #tpu.pipeline_mode<synchronous>, transform_indices = @transform_4, window_bounds = array<i64: 32, 32>}, {pipeline_mode = #tpu.pipeline_mode<synchronous>, transform_indices = @transform_5, window_bounds = array<i64: 8, 32>}, {pipeline_mode = #tpu.pipeline_mode<synchronous>, transform_indices = @transform_6, window_bounds = array<i64: 8, 32>}, {transform_indices = @transform_7, window_bounds = array<i64: 1, 8, 32>}]} {
    %c8_i32 = arith.constant 8 : i32
    %0 = arith.muli %arg1, %c8_i32 : i32
    %1 = tpu.assume_multiple %0, 8 : i32
    %c0_i32 = arith.constant 0 : i32
    %2 = arith.cmpi eq, %arg1, %c0_i32 : i32
    %3 = arith.extui %2 : i1 to i32
    %c0_i32_0 = arith.constant 0 : i32
    %4 = arith.cmpi ne, %3, %c0_i32_0 : i32
    scf.if %4 {
      %c0_48 = arith.constant 0 : index
      %c0_49 = arith.constant 0 : index
      %c0_50 = arith.constant 0 : index
      %100 = vector.load %arg2[%c0_48, %c0_49, %c0_50] : memref<1x8x32xf32, #tpu.memory_space<vmem>>, vector<1x8x32xf32>
      %101 = vector.shape_cast %100 : vector<1x8x32xf32> to vector<8x32xf32>
      %c0_51 = arith.constant 0 : index
      %c0_52 = arith.constant 0 : index
      %102 = vector.load %arg3[%c0_51, %c0_52] : memref<1x32xf32, #tpu.memory_space<vmem>>, vector<1x32xf32>
      %103 = vector.shape_cast %102 : vector<1x32xf32> to vector<32xf32>
      %104 = arith.mulf %101, %101 : vector<8x32xf32>
      %cst_53 = arith.constant dense<0.000000e+00> : vector<8xf32>
      %105 = vector.multi_reduction <add>, %104, %cst_53 [1] : vector<8x32xf32> to vector<8xf32>
      %106 = vector.shape_cast %105 : vector<8xf32> to vector<8x1xf32>
      %cst_54 = arith.constant 3.200000e+01 : f32
      %107 = vector.broadcast %cst_54 : f32 to vector<8x1xf32>
      %108 = arith.divf %106, %107 : vector<8x1xf32>
      %cst_55 = arith.constant 9.99999974E-6 : f32
      %109 = vector.broadcast %cst_55 : f32 to vector<8x1xf32>
      %110 = arith.addf %108, %109 : vector<8x1xf32>
      %111 = math.rsqrt %110 : vector<8x1xf32>
      %112 = vector.broadcast %111 : vector<8x1xf32> to vector<8x32xf32>
      %113 = arith.mulf %101, %112 : vector<8x32xf32>
      %114 = vector.shape_cast %103 : vector<32xf32> to vector<1x32xf32>
      %115 = vector.broadcast %114 : vector<1x32xf32> to vector<8x32xf32>
      %116 = arith.mulf %113, %115 : vector<8x32xf32>
      %117 = arith.truncf %116 : vector<8x32xf32> to vector<8x32xbf16>
      %c0_56 = arith.constant 0 : index
      %c0_57 = arith.constant 0 : index
      %118 = vector.load %arg5[%c0_56, %c0_57] : memref<32x64xbf16, #tpu.memory_space<vmem>>, vector<32x64xbf16>
      %cst_58 = arith.constant dense<0.000000e+00> : vector<8x64xf32>
      %119 = tpu.matmul %117, %118, %cst_58 {dimension_numbers = #tpu.dot_dimension_numbers<[1], [0], [0], [1], [0, 0, 1, 1], [], []>} : vector<8x32xbf16>, vector<32x64xbf16>, vector<8x64xf32> -> vector<8x64xf32>
      %120 = vector.extract_strided_slice %119 {offsets = [0, 0], sizes = [8, 32], strides = [1, 1]} : vector<8x64xf32> to vector<8x32xf32>
      %121 = vector.extract_strided_slice %119 {offsets = [0, 32], sizes = [8, 32], strides = [1, 1]} : vector<8x64xf32> to vector<8x32xf32>
      %c0_59 = arith.constant 0 : index
      %c0_60 = arith.constant 0 : index
      %122 = vector.load %arg7[%c0_59, %c0_60] : memref<8x32xf32, #tpu.memory_space<vmem>>, vector<8x32xf32>
      %123 = arith.mulf %120, %122 : vector<8x32xf32>
      %124 = tpu.iota {dimensions = array<i32: 1>} : vector<8x32xi32>
      %c1_i32_61 = arith.constant 1 : i32
      %125 = vector.broadcast %c1_i32_61 : i32 to vector<8x32xi32>
      %126 = arith.andi %124, %125 : vector<8x32xi32>
      %c0_i32_62 = arith.constant 0 : i32
      %127 = vector.broadcast %c0_i32_62 : i32 to vector<8x32xi32>
      %128 = arith.cmpi eq, %126, %127 : vector<8x32xi32>
      %c31_i32_63 = arith.constant 31 : i32
      %129 = tpu.dynamic_rotate %120 by %c31_i32_63 dim 1 : vector<8x32xf32>, i32 -> vector<8x32xf32>
      %c1_i32_64 = arith.constant 1 : i32
      %130 = tpu.dynamic_rotate %120 by %c1_i32_64 dim 1 : vector<8x32xf32>, i32 -> vector<8x32xf32>
      %cst_65 = arith.constant 0.000000e+00 : f32
      %131 = vector.broadcast %cst_65 : f32 to vector<8x32xf32>
      %132 = arith.subf %131, %129 : vector<8x32xf32>
      %133 = arith.select %128, %132, %130 : vector<8x32xi1>, vector<8x32xf32>
      %c0_66 = arith.constant 0 : index
      %c0_67 = arith.constant 0 : index
      %134 = vector.load %arg8[%c0_66, %c0_67] : memref<8x32xf32, #tpu.memory_space<vmem>>, vector<8x32xf32>
      %135 = arith.mulf %133, %134 : vector<8x32xf32>
      %136 = arith.addf %123, %135 : vector<8x32xf32>
      %137 = arith.truncf %136 : vector<8x32xf32> to vector<8x32xbf16>
      %c0_68 = arith.constant 0 : index
      %c0_69 = arith.constant 0 : index
      %138 = vector.load %arg10[%c0_68, %c0_69] : memref<8x32xbf16, #tpu.memory_space<vmem>>, vector<8x32xbf16>
      tpu.vector_store %arg10[%c0_68, %c0_69], %137 {strides = array<i32>} : memref<8x32xbf16, #tpu.memory_space<vmem>>, vector<8x32xbf16>,
      %139 = arith.truncf %121 : vector<8x32xf32> to vector<8x32xbf16>
      %c0_70 = arith.constant 0 : index
      %c0_71 = arith.constant 0 : index
      %140 = vector.load %arg11[%c0_70, %c0_71] : memref<8x32xbf16, #tpu.memory_space<vmem>>, vector<8x32xbf16>
      tpu.vector_store %arg11[%c0_70, %c0_71], %139 {strides = array<i32>} : memref<8x32xbf16, #tpu.memory_space<vmem>>, vector<8x32xbf16>,
    } else {
    }
    %c0 = arith.constant 0 : index
    %5 = arith.index_cast %1 : i32 to index
    %c0_1 = arith.constant 0 : index
    %6 = vector.load %arg2[%c0, %5, %c0_1] : memref<1x8x32xf32, #tpu.memory_space<vmem>>, vector<1x8x32xf32>
    %7 = vector.shape_cast %6 : vector<1x8x32xf32> to vector<8x32xf32>
    %c0_2 = arith.constant 0 : index
    %c0_3 = arith.constant 0 : index
    %8 = vector.load %arg3[%c0_2, %c0_3] : memref<1x32xf32, #tpu.memory_space<vmem>>, vector<1x32xf32>
    %9 = vector.shape_cast %8 : vector<1x32xf32> to vector<32xf32>
    %10 = arith.mulf %7, %7 : vector<8x32xf32>
    %cst = arith.constant dense<0.000000e+00> : vector<8xf32>
    %11 = vector.multi_reduction <add>, %10, %cst [1] : vector<8x32xf32> to vector<8xf32>
    %12 = vector.shape_cast %11 : vector<8xf32> to vector<8x1xf32>
    %cst_4 = arith.constant 3.200000e+01 : f32
    %13 = vector.broadcast %cst_4 : f32 to vector<8x1xf32>
    %14 = arith.divf %12, %13 : vector<8x1xf32>
    %cst_5 = arith.constant 9.99999974E-6 : f32
    %15 = vector.broadcast %cst_5 : f32 to vector<8x1xf32>
    %16 = arith.addf %14, %15 : vector<8x1xf32>
    %17 = math.rsqrt %16 : vector<8x1xf32>
    %18 = vector.broadcast %17 : vector<8x1xf32> to vector<8x32xf32>
    %19 = arith.mulf %7, %18 : vector<8x32xf32>
    %20 = vector.shape_cast %9 : vector<32xf32> to vector<1x32xf32>
    %21 = vector.broadcast %20 : vector<1x32xf32> to vector<8x32xf32>
    %22 = arith.mulf %19, %21 : vector<8x32xf32>
    %23 = arith.truncf %22 : vector<8x32xf32> to vector<8x32xbf16>
    %c0_6 = arith.constant 0 : index
    %c0_7 = arith.constant 0 : index
    %24 = vector.load %arg4[%c0_6, %c0_7] : memref<32x32xbf16, #tpu.memory_space<vmem>>, vector<32x32xbf16>
    %cst_8 = arith.constant dense<0.000000e+00> : vector<8x32xf32>
    %25 = tpu.matmul %23, %24, %cst_8 {dimension_numbers = #tpu.dot_dimension_numbers<[1], [0], [0], [1], [0, 0, 1, 1], [], []>} : vector<8x32xbf16>, vector<32x32xbf16>, vector<8x32xf32> -> vector<8x32xf32>
    %26 = arith.index_cast %1 : i32 to index
    %c0_9 = arith.constant 0 : index
    %27 = vector.load %arg7[%26, %c0_9] : memref<8x32xf32, #tpu.memory_space<vmem>>, vector<8x32xf32>
    %28 = arith.index_cast %1 : i32 to index
    %c0_10 = arith.constant 0 : index
    %29 = vector.load %arg8[%28, %c0_10] : memref<8x32xf32, #tpu.memory_space<vmem>>, vector<8x32xf32>
    %30 = arith.mulf %25, %27 : vector<8x32xf32>
    %31 = tpu.iota {dimensions = array<i32: 1>} : vector<8x32xi32>
    %c1_i32 = arith.constant 1 : i32
    %32 = vector.broadcast %c1_i32 : i32 to vector<8x32xi32>
    %33 = arith.andi %31, %32 : vector<8x32xi32>
    %c0_i32_11 = arith.constant 0 : i32
    %34 = vector.broadcast %c0_i32_11 : i32 to vector<8x32xi32>
    %35 = arith.cmpi eq, %33, %34 : vector<8x32xi32>
    %c31_i32 = arith.constant 31 : i32
    %36 = tpu.dynamic_rotate %25 by %c31_i32 dim 1 : vector<8x32xf32>, i32 -> vector<8x32xf32>
    %c1_i32_12 = arith.constant 1 : i32
    %37 = tpu.dynamic_rotate %25 by %c1_i32_12 dim 1 : vector<8x32xf32>, i32 -> vector<8x32xf32>
    %cst_13 = arith.constant 0.000000e+00 : f32
    %38 = vector.broadcast %cst_13 : f32 to vector<8x32xf32>
    %39 = arith.subf %38, %36 : vector<8x32xf32>
    %40 = arith.select %35, %39, %37 : vector<8x32xi1>, vector<8x32xf32>
    %41 = arith.mulf %40, %29 : vector<8x32xf32>
    %42 = arith.addf %30, %41 : vector<8x32xf32>
    %43 = arith.truncf %42 : vector<8x32xf32> to vector<8x32xbf16>
    %c1_i32_14 = arith.constant 1 : i32
    %44 = arith.addi %arg1, %c1_i32_14 : i32
    %45 = vector.extract_strided_slice %43 {offsets = [0, 0], sizes = [8, 8], strides = [1, 1]} : vector<8x32xbf16> to vector<8x8xbf16>
    %cst_15 = arith.constant -1.000000e+30 : f32
    %46 = vector.broadcast %cst_15 : f32 to vector<8x1xf32>
    %cst_16 = arith.constant 0.000000e+00 : f32
    %47 = vector.broadcast %cst_16 : f32 to vector<8x1xf32>
    %cst_17 = arith.constant 0.000000e+00 : f32
    %48 = vector.broadcast %cst_17 : f32 to vector<8x8xf32>
    %c0_i32_18 = arith.constant 0 : i32
    %49 = arith.subi %44, %c0_i32_18 : i32
    %50 = arith.addi %c0_i32_18, %49 : i32
    %c1_i32_19 = arith.constant 1 : i32
    %51:3 = scf.for %arg13 = %c0_i32_18 to %50 step %c1_i32_19 iter_args(%arg14 = %46, %arg15 = %47, %arg16 = %48) -> (vector<8x1xf32>, vector<8x1xf32>, vector<8x8xf32>)  : i32 {
      %c8_i32_48 = arith.constant 8 : i32
      %100 = arith.muli %arg13, %c8_i32_48 : i32
      %101 = tpu.assume_multiple %100, 8 : i32
      %102 = arith.index_cast %101 : i32 to index
      %c0_49 = arith.constant 0 : index
      %103 = vector.load %arg10[%102, %c0_49] : memref<8x32xbf16, #tpu.memory_space<vmem>>, vector<8x8xbf16>
      %104 = arith.index_cast %101 : i32 to index
      %c0_50 = arith.constant 0 : index
      %105 = vector.load %arg11[%104, %c0_50] : memref<8x32xbf16, #tpu.memory_space<vmem>>, vector<8x8xbf16>
      %cst_51 = arith.constant dense<0.000000e+00> : vector<8x8xf32>
      %106 = tpu.matmul %45, %103, %cst_51 {dimension_numbers = #tpu.dot_dimension_numbers<[1], [1], [0], [0], [0, 0, 1, 0], [], []>} : vector<8x8xbf16>, vector<8x8xbf16>, vector<8x8xf32> -> vector<8x8xf32>
      %107 = tpu.iota {dimensions = array<i32: 1>} : vector<8x8xi32>
      %108 = vector.broadcast %101 : i32 to vector<8x8xi32>
      %109 = arith.addi %108, %107 : vector<8x8xi32>
      %110 = tpu.iota {dimensions = array<i32: 0>} : vector<8x8xi32>
      %111 = vector.broadcast %1 : i32 to vector<8x8xi32>
      %112 = arith.addi %111, %110 : vector<8x8xi32>
      %113 = arith.cmpi sle, %109, %112 : vector<8x8xi32>
      %cst_52 = arith.constant -1.000000e+30 : f32
      %114 = vector.broadcast %cst_52 : f32 to vector<8x8xf32>
      %115 = arith.select %113, %106, %114 : vector<8x8xi1>, vector<8x8xf32>
      %cst_53 = arith.constant dense<0xFF800000> : vector<8xf32>
      %116 = vector.multi_reduction <maximumf>, %115, %cst_53 [1] : vector<8x8xf32> to vector<8xf32>
      %117 = vector.shape_cast %116 : vector<8xf32> to vector<8x1xf32>
      %118 = arith.maximumf %arg14, %117 : vector<8x1xf32>
      %119 = arith.subf %arg14, %118 : vector<8x1xf32>
      %120 = math.exp %119 : vector<8x1xf32>
      %121 = vector.broadcast %118 : vector<8x1xf32> to vector<8x8xf32>
      %122 = arith.subf %115, %121 : vector<8x8xf32>
      %123 = math.exp %122 : vector<8x8xf32>
      %124 = arith.mulf %120, %arg15 : vector<8x1xf32>
      %cst_54 = arith.constant dense<0.000000e+00> : vector<8xf32>
      %125 = vector.multi_reduction <add>, %123, %cst_54 [1] : vector<8x8xf32> to vector<8xf32>
      %126 = vector.shape_cast %125 : vector<8xf32> to vector<8x1xf32>
      %127 = arith.addf %124, %126 : vector<8x1xf32>
      %128 = vector.broadcast %120 : vector<8x1xf32> to vector<8x8xf32>
      %129 = arith.mulf %128, %arg16 : vector<8x8xf32>
      %130 = arith.truncf %123 : vector<8x8xf32> to vector<8x8xbf16>
      %cst_55 = arith.constant dense<0.000000e+00> : vector<8x8xf32>
      %131 = tpu.matmul %130, %105, %cst_55 {dimension_numbers = #tpu.dot_dimension_numbers<[1], [0], [0], [1], [0, 0, 1, 1], [], []>} : vector<8x8xbf16>, vector<8x8xbf16>, vector<8x8xf32> -> vector<8x8xf32>
      %132 = arith.addf %129, %131 : vector<8x8xf32>
      scf.yield %118, %127, %132 : vector<8x1xf32>, vector<8x1xf32>, vector<8x8xf32>
    }
    %52 = tpu.reciprocal %51#1 {approx = true} : vector<8x1xf32> -> vector<8x1xf32>
    %53 = vector.broadcast %52 : vector<8x1xf32> to vector<8x8xf32>
    %54 = arith.mulf %51#2, %53 : vector<8x8xf32>
    %55 = arith.truncf %54 : vector<8x8xf32> to vector<8x8xbf16>
    %c0_20 = arith.constant 0 : index
    %c0_21 = arith.constant 0 : index
    %56 = vector.load %arg12[%c0_20, %c0_21] : memref<8x32xbf16, #tpu.memory_space<vmem>>, vector<8x8xbf16>
    tpu.vector_store %arg12[%c0_20, %c0_21], %55 {strides = array<i32>} : memref<8x32xbf16, #tpu.memory_space<vmem>>, vector<8x8xbf16>,
    %57 = vector.extract_strided_slice %43 {offsets = [0, 8], sizes = [8, 8], strides = [1, 1]} : vector<8x32xbf16> to vector<8x8xbf16>
    %cst_22 = arith.constant -1.000000e+30 : f32
    %58 = vector.broadcast %cst_22 : f32 to vector<8x1xf32>
    %cst_23 = arith.constant 0.000000e+00 : f32
    %59 = vector.broadcast %cst_23 : f32 to vector<8x1xf32>
    %cst_24 = arith.constant 0.000000e+00 : f32
    %60 = vector.broadcast %cst_24 : f32 to vector<8x8xf32>
    %c0_i32_25 = arith.constant 0 : i32
    %61 = arith.subi %44, %c0_i32_25 : i32
    %62 = arith.addi %c0_i32_25, %61 : i32
    %c1_i32_26 = arith.constant 1 : i32
    %63:3 = scf.for %arg13 = %c0_i32_25 to %62 step %c1_i32_26 iter_args(%arg14 = %58, %arg15 = %59, %arg16 = %60) -> (vector<8x1xf32>, vector<8x1xf32>, vector<8x8xf32>)  : i32 {
      %c8_i32_48 = arith.constant 8 : i32
      %100 = arith.muli %arg13, %c8_i32_48 : i32
      %101 = tpu.assume_multiple %100, 8 : i32
      %102 = arith.index_cast %101 : i32 to index
      %c8_49 = arith.constant 8 : index
      %103 = vector.load %arg10[%102, %c8_49] : memref<8x32xbf16, #tpu.memory_space<vmem>>, vector<8x8xbf16>
      %104 = arith.index_cast %101 : i32 to index
      %c8_50 = arith.constant 8 : index
      %105 = vector.load %arg11[%104, %c8_50] : memref<8x32xbf16, #tpu.memory_space<vmem>>, vector<8x8xbf16>
      %cst_51 = arith.constant dense<0.000000e+00> : vector<8x8xf32>
      %106 = tpu.matmul %57, %103, %cst_51 {dimension_numbers = #tpu.dot_dimension_numbers<[1], [1], [0], [0], [0, 0, 1, 0], [], []>} : vector<8x8xbf16>, vector<8x8xbf16>, vector<8x8xf32> -> vector<8x8xf32>
      %107 = tpu.iota {dimensions = array<i32: 1>} : vector<8x8xi32>
      %108 = vector.broadcast %101 : i32 to vector<8x8xi32>
      %109 = arith.addi %108, %107 : vector<8x8xi32>
      %110 = tpu.iota {dimensions = array<i32: 0>} : vector<8x8xi32>
      %111 = vector.broadcast %1 : i32 to vector<8x8xi32>
      %112 = arith.addi %111, %110 : vector<8x8xi32>
      %113 = arith.cmpi sle, %109, %112 : vector<8x8xi32>
      %cst_52 = arith.constant -1.000000e+30 : f32
      %114 = vector.broadcast %cst_52 : f32 to vector<8x8xf32>
      %115 = arith.select %113, %106, %114 : vector<8x8xi1>, vector<8x8xf32>
      %cst_53 = arith.constant dense<0xFF800000> : vector<8xf32>
      %116 = vector.multi_reduction <maximumf>, %115, %cst_53 [1] : vector<8x8xf32> to vector<8xf32>
      %117 = vector.shape_cast %116 : vector<8xf32> to vector<8x1xf32>
      %118 = arith.maximumf %arg14, %117 : vector<8x1xf32>
      %119 = arith.subf %arg14, %118 : vector<8x1xf32>
      %120 = math.exp %119 : vector<8x1xf32>
      %121 = vector.broadcast %118 : vector<8x1xf32> to vector<8x8xf32>
      %122 = arith.subf %115, %121 : vector<8x8xf32>
      %123 = math.exp %122 : vector<8x8xf32>
      %124 = arith.mulf %120, %arg15 : vector<8x1xf32>
      %cst_54 = arith.constant dense<0.000000e+00> : vector<8xf32>
      %125 = vector.multi_reduction <add>, %123, %cst_54 [1] : vector<8x8xf32> to vector<8xf32>
      %126 = vector.shape_cast %125 : vector<8xf32> to vector<8x1xf32>
      %127 = arith.addf %124, %126 : vector<8x1xf32>
      %128 = vector.broadcast %120 : vector<8x1xf32> to vector<8x8xf32>
      %129 = arith.mulf %128, %arg16 : vector<8x8xf32>
      %130 = arith.truncf %123 : vector<8x8xf32> to vector<8x8xbf16>
      %cst_55 = arith.constant dense<0.000000e+00> : vector<8x8xf32>
      %131 = tpu.matmul %130, %105, %cst_55 {dimension_numbers = #tpu.dot_dimension_numbers<[1], [0], [0], [1], [0, 0, 1, 1], [], []>} : vector<8x8xbf16>, vector<8x8xbf16>, vector<8x8xf32> -> vector<8x8xf32>
      %132 = arith.addf %129, %131 : vector<8x8xf32>
      scf.yield %118, %127, %132 : vector<8x1xf32>, vector<8x1xf32>, vector<8x8xf32>
    }
    %64 = tpu.reciprocal %63#1 {approx = true} : vector<8x1xf32> -> vector<8x1xf32>
    %65 = vector.broadcast %64 : vector<8x1xf32> to vector<8x8xf32>
    %66 = arith.mulf %63#2, %65 : vector<8x8xf32>
    %67 = arith.truncf %66 : vector<8x8xf32> to vector<8x8xbf16>
    %c0_27 = arith.constant 0 : index
    %c8 = arith.constant 8 : index
    %68 = vector.load %arg12[%c0_27, %c8] : memref<8x32xbf16, #tpu.memory_space<vmem>>, vector<8x8xbf16>
    tpu.vector_store %arg12[%c0_27, %c8], %67 {strides = array<i32>} : memref<8x32xbf16, #tpu.memory_space<vmem>>, vector<8x8xbf16>,
    %69 = vector.extract_strided_slice %43 {offsets = [0, 16], sizes = [8, 8], strides = [1, 1]} : vector<8x32xbf16> to vector<8x8xbf16>
    %cst_28 = arith.constant -1.000000e+30 : f32
    %70 = vector.broadcast %cst_28 : f32 to vector<8x1xf32>
    %cst_29 = arith.constant 0.000000e+00 : f32
    %71 = vector.broadcast %cst_29 : f32 to vector<8x1xf32>
    %cst_30 = arith.constant 0.000000e+00 : f32
    %72 = vector.broadcast %cst_30 : f32 to vector<8x8xf32>
    %c0_i32_31 = arith.constant 0 : i32
    %73 = arith.subi %44, %c0_i32_31 : i32
    %74 = arith.addi %c0_i32_31, %73 : i32
    %c1_i32_32 = arith.constant 1 : i32
    %75:3 = scf.for %arg13 = %c0_i32_31 to %74 step %c1_i32_32 iter_args(%arg14 = %70, %arg15 = %71, %arg16 = %72) -> (vector<8x1xf32>, vector<8x1xf32>, vector<8x8xf32>)  : i32 {
      %c8_i32_48 = arith.constant 8 : i32
      %100 = arith.muli %arg13, %c8_i32_48 : i32
      %101 = tpu.assume_multiple %100, 8 : i32
      %102 = arith.index_cast %101 : i32 to index
      %c16_49 = arith.constant 16 : index
      %103 = vector.load %arg10[%102, %c16_49] : memref<8x32xbf16, #tpu.memory_space<vmem>>, vector<8x8xbf16>
      %104 = arith.index_cast %101 : i32 to index
      %c16_50 = arith.constant 16 : index
      %105 = vector.load %arg11[%104, %c16_50] : memref<8x32xbf16, #tpu.memory_space<vmem>>, vector<8x8xbf16>
      %cst_51 = arith.constant dense<0.000000e+00> : vector<8x8xf32>
      %106 = tpu.matmul %69, %103, %cst_51 {dimension_numbers = #tpu.dot_dimension_numbers<[1], [1], [0], [0], [0, 0, 1, 0], [], []>} : vector<8x8xbf16>, vector<8x8xbf16>, vector<8x8xf32> -> vector<8x8xf32>
      %107 = tpu.iota {dimensions = array<i32: 1>} : vector<8x8xi32>
      %108 = vector.broadcast %101 : i32 to vector<8x8xi32>
      %109 = arith.addi %108, %107 : vector<8x8xi32>
      %110 = tpu.iota {dimensions = array<i32: 0>} : vector<8x8xi32>
      %111 = vector.broadcast %1 : i32 to vector<8x8xi32>
      %112 = arith.addi %111, %110 : vector<8x8xi32>
      %113 = arith.cmpi sle, %109, %112 : vector<8x8xi32>
      %cst_52 = arith.constant -1.000000e+30 : f32
      %114 = vector.broadcast %cst_52 : f32 to vector<8x8xf32>
      %115 = arith.select %113, %106, %114 : vector<8x8xi1>, vector<8x8xf32>
      %cst_53 = arith.constant dense<0xFF800000> : vector<8xf32>
      %116 = vector.multi_reduction <maximumf>, %115, %cst_53 [1] : vector<8x8xf32> to vector<8xf32>
      %117 = vector.shape_cast %116 : vector<8xf32> to vector<8x1xf32>
      %118 = arith.maximumf %arg14, %117 : vector<8x1xf32>
      %119 = arith.subf %arg14, %118 : vector<8x1xf32>
      %120 = math.exp %119 : vector<8x1xf32>
      %121 = vector.broadcast %118 : vector<8x1xf32> to vector<8x8xf32>
      %122 = arith.subf %115, %121 : vector<8x8xf32>
      %123 = math.exp %122 : vector<8x8xf32>
      %124 = arith.mulf %120, %arg15 : vector<8x1xf32>
      %cst_54 = arith.constant dense<0.000000e+00> : vector<8xf32>
      %125 = vector.multi_reduction <add>, %123, %cst_54 [1] : vector<8x8xf32> to vector<8xf32>
      %126 = vector.shape_cast %125 : vector<8xf32> to vector<8x1xf32>
      %127 = arith.addf %124, %126 : vector<8x1xf32>
      %128 = vector.broadcast %120 : vector<8x1xf32> to vector<8x8xf32>
      %129 = arith.mulf %128, %arg16 : vector<8x8xf32>
      %130 = arith.truncf %123 : vector<8x8xf32> to vector<8x8xbf16>
      %cst_55 = arith.constant dense<0.000000e+00> : vector<8x8xf32>
      %131 = tpu.matmul %130, %105, %cst_55 {dimension_numbers = #tpu.dot_dimension_numbers<[1], [0], [0], [1], [0, 0, 1, 1], [], []>} : vector<8x8xbf16>, vector<8x8xbf16>, vector<8x8xf32> -> vector<8x8xf32>
      %132 = arith.addf %129, %131 : vector<8x8xf32>
      scf.yield %118, %127, %132 : vector<8x1xf32>, vector<8x1xf32>, vector<8x8xf32>
    }
    %76 = tpu.reciprocal %75#1 {approx = true} : vector<8x1xf32> -> vector<8x1xf32>
    %77 = vector.broadcast %76 : vector<8x1xf32> to vector<8x8xf32>
    %78 = arith.mulf %75#2, %77 : vector<8x8xf32>
    %79 = arith.truncf %78 : vector<8x8xf32> to vector<8x8xbf16>
    %c0_33 = arith.constant 0 : index
    %c16 = arith.constant 16 : index
    %80 = vector.load %arg12[%c0_33, %c16] : memref<8x32xbf16, #tpu.memory_space<vmem>>, vector<8x8xbf16>
    tpu.vector_store %arg12[%c0_33, %c16], %79 {strides = array<i32>} : memref<8x32xbf16, #tpu.memory_space<vmem>>, vector<8x8xbf16>,
    %81 = vector.extract_strided_slice %43 {offsets = [0, 24], sizes = [8, 8], strides = [1, 1]} : vector<8x32xbf16> to vector<8x8xbf16>
    %cst_34 = arith.constant -1.000000e+30 : f32
    %82 = vector.broadcast %cst_34 : f32 to vector<8x1xf32>
    %cst_35 = arith.constant 0.000000e+00 : f32
    %83 = vector.broadcast %cst_35 : f32 to vector<8x1xf32>
    %cst_36 = arith.constant 0.000000e+00 : f32
    %84 = vector.broadcast %cst_36 : f32 to vector<8x8xf32>
    %c0_i32_37 = arith.constant 0 : i32
    %85 = arith.subi %44, %c0_i32_37 : i32
    %86 = arith.addi %c0_i32_37, %85 : i32
    %c1_i32_38 = arith.constant 1 : i32
    %87:3 = scf.for %arg13 = %c0_i32_37 to %86 step %c1_i32_38 iter_args(%arg14 = %82, %arg15 = %83, %arg16 = %84) -> (vector<8x1xf32>, vector<8x1xf32>, vector<8x8xf32>)  : i32 {
      %c8_i32_48 = arith.constant 8 : i32
      %100 = arith.muli %arg13, %c8_i32_48 : i32
      %101 = tpu.assume_multiple %100, 8 : i32
      %102 = arith.index_cast %101 : i32 to index
      %c24_49 = arith.constant 24 : index
      %103 = vector.load %arg10[%102, %c24_49] : memref<8x32xbf16, #tpu.memory_space<vmem>>, vector<8x8xbf16>
      %104 = arith.index_cast %101 : i32 to index
      %c24_50 = arith.constant 24 : index
      %105 = vector.load %arg11[%104, %c24_50] : memref<8x32xbf16, #tpu.memory_space<vmem>>, vector<8x8xbf16>
      %cst_51 = arith.constant dense<0.000000e+00> : vector<8x8xf32>
      %106 = tpu.matmul %81, %103, %cst_51 {dimension_numbers = #tpu.dot_dimension_numbers<[1], [1], [0], [0], [0, 0, 1, 0], [], []>} : vector<8x8xbf16>, vector<8x8xbf16>, vector<8x8xf32> -> vector<8x8xf32>
      %107 = tpu.iota {dimensions = array<i32: 1>} : vector<8x8xi32>
      %108 = vector.broadcast %101 : i32 to vector<8x8xi32>
      %109 = arith.addi %108, %107 : vector<8x8xi32>
      %110 = tpu.iota {dimensions = array<i32: 0>} : vector<8x8xi32>
      %111 = vector.broadcast %1 : i32 to vector<8x8xi32>
      %112 = arith.addi %111, %110 : vector<8x8xi32>
      %113 = arith.cmpi sle, %109, %112 : vector<8x8xi32>
      %cst_52 = arith.constant -1.000000e+30 : f32
      %114 = vector.broadcast %cst_52 : f32 to vector<8x8xf32>
      %115 = arith.select %113, %106, %114 : vector<8x8xi1>, vector<8x8xf32>
      %cst_53 = arith.constant dense<0xFF800000> : vector<8xf32>
      %116 = vector.multi_reduction <maximumf>, %115, %cst_53 [1] : vector<8x8xf32> to vector<8xf32>
      %117 = vector.shape_cast %116 : vector<8xf32> to vector<8x1xf32>
      %118 = arith.maximumf %arg14, %117 : vector<8x1xf32>
      %119 = arith.subf %arg14, %118 : vector<8x1xf32>
      %120 = math.exp %119 : vector<8x1xf32>
      %121 = vector.broadcast %118 : vector<8x1xf32> to vector<8x8xf32>
      %122 = arith.subf %115, %121 : vector<8x8xf32>
      %123 = math.exp %122 : vector<8x8xf32>
      %124 = arith.mulf %120, %arg15 : vector<8x1xf32>
      %cst_54 = arith.constant dense<0.000000e+00> : vector<8xf32>
      %125 = vector.multi_reduction <add>, %123, %cst_54 [1] : vector<8x8xf32> to vector<8xf32>
      %126 = vector.shape_cast %125 : vector<8xf32> to vector<8x1xf32>
      %127 = arith.addf %124, %126 : vector<8x1xf32>
      %128 = vector.broadcast %120 : vector<8x1xf32> to vector<8x8xf32>
      %129 = arith.mulf %128, %arg16 : vector<8x8xf32>
      %130 = arith.truncf %123 : vector<8x8xf32> to vector<8x8xbf16>
      %cst_55 = arith.constant dense<0.000000e+00> : vector<8x8xf32>
      %131 = tpu.matmul %130, %105, %cst_55 {dimension_numbers = #tpu.dot_dimension_numbers<[1], [0], [0], [1], [0, 0, 1, 1], [], []>} : vector<8x8xbf16>, vector<8x8xbf16>, vector<8x8xf32> -> vector<8x8xf32>
      %132 = arith.addf %129, %131 : vector<8x8xf32>
      scf.yield %118, %127, %132 : vector<8x1xf32>, vector<8x1xf32>, vector<8x8xf32>
    }
    %88 = tpu.reciprocal %87#1 {approx = true} : vector<8x1xf32> -> vector<8x1xf32>
    %89 = vector.broadcast %88 : vector<8x1xf32> to vector<8x8xf32>
    %90 = arith.mulf %87#2, %89 : vector<8x8xf32>
    %91 = arith.truncf %90 : vector<8x8xf32> to vector<8x8xbf16>
    %c0_39 = arith.constant 0 : index
    %c24 = arith.constant 24 : index
    %92 = vector.load %arg12[%c0_39, %c24] : memref<8x32xbf16, #tpu.memory_space<vmem>>, vector<8x8xbf16>
    tpu.vector_store %arg12[%c0_39, %c24], %91 {strides = array<i32>} : memref<8x32xbf16, #tpu.memory_space<vmem>>, vector<8x8xbf16>,
    %c0_40 = arith.constant 0 : index
    %c0_41 = arith.constant 0 : index
    %93 = vector.load %arg12[%c0_40, %c0_41] : memref<8x32xbf16, #tpu.memory_space<vmem>>, vector<8x32xbf16>
    %c0_42 = arith.constant 0 : index
    %c0_43 = arith.constant 0 : index
    %94 = vector.load %arg6[%c0_42, %c0_43] : memref<32x32xbf16, #tpu.memory_space<vmem>>, vector<32x32xbf16>
    %cst_44 = arith.constant dense<0.000000e+00> : vector<8x32xf32>
    %95 = tpu.matmul %93, %94, %cst_44 {dimension_numbers = #tpu.dot_dimension_numbers<[1], [0], [0], [1], [0, 0, 1, 1], [], []>} : vector<8x32xbf16>, vector<32x32xbf16>, vector<8x32xf32> -> vector<8x32xf32>
    %96 = arith.addf %7, %95 : vector<8x32xf32>
    %c0_45 = arith.constant 0 : index
    %c0_46 = arith.constant 0 : index
    %c0_47 = arith.constant 0 : index
    %97 = vector.load %arg9[%c0_45, %c0_46, %c0_47] : memref<1x8x32xf32, #tpu.memory_space<vmem>>, vector<1x8x32xf32>
    %98 = vector.shape_cast %97 : vector<1x8x32xf32> to vector<8x32xf32>
    %99 = vector.shape_cast %96 : vector<8x32xf32> to vector<1x8x32xf32>
    tpu.vector_store %arg9[%c0_45, %c0_46, %c0_47], %99 {strides = array<i32>} : memref<1x8x32xf32, #tpu.memory_space<vmem>>, vector<1x8x32xf32>,
    return
  }
  func.func @transform_0(%arg0: i32, %arg1: i32) -> (i32, i32, i32) {
    %c0_i32 = arith.constant 0 : i32
    %c0_i32_0 = arith.constant 0 : i32
    %c0_i32_1 = arith.constant 0 : i32
    return %arg0, %c0_i32, %c0_i32_0 : i32, i32, i32
  }
  func.func @transform_1(%arg0: i32, %arg1: i32) -> (i32, i32) {
    %c0_i32 = arith.constant 0 : i32
    %c0_i32_0 = arith.constant 0 : i32
    %c0_i32_1 = arith.constant 0 : i32
    return %c0_i32, %c0_i32_0 : i32, i32
  }
  func.func @transform_2(%arg0: i32, %arg1: i32) -> (i32, i32) {
    %c0_i32 = arith.constant 0 : i32
    %c0_i32_0 = arith.constant 0 : i32
    %c0_i32_1 = arith.constant 0 : i32
    return %c0_i32, %c0_i32_0 : i32, i32
  }
  func.func @transform_3(%arg0: i32, %arg1: i32) -> (i32, i32) {
    %c0_i32 = arith.constant 0 : i32
    %c0_i32_0 = arith.constant 0 : i32
    %c0_i32_1 = arith.constant 0 : i32
    return %c0_i32, %c0_i32_0 : i32, i32
  }
  func.func @transform_4(%arg0: i32, %arg1: i32) -> (i32, i32) {
    %c0_i32 = arith.constant 0 : i32
    %c0_i32_0 = arith.constant 0 : i32
    %c0_i32_1 = arith.constant 0 : i32
    return %c0_i32, %c0_i32_0 : i32, i32
  }
  func.func @transform_5(%arg0: i32, %arg1: i32) -> (i32, i32) {
    %c0_i32 = arith.constant 0 : i32
    %c0_i32_0 = arith.constant 0 : i32
    %c0_i32_1 = arith.constant 0 : i32
    return %c0_i32, %c0_i32_0 : i32, i32
  }
  func.func @transform_6(%arg0: i32, %arg1: i32) -> (i32, i32) {
    %c0_i32 = arith.constant 0 : i32
    %c0_i32_0 = arith.constant 0 : i32
    %c0_i32_1 = arith.constant 0 : i32
    return %c0_i32, %c0_i32_0 : i32, i32
  }
  func.func @transform_7(%arg0: i32, %arg1: i32) -> (i32, i32, i32) {
    %c0_i32 = arith.constant 0 : i32
    %c0_i32_0 = arith.constant 0 : i32
    return %arg0, %arg1, %c0_i32 : i32, i32, i32
  }
}

</mosaic_0001>

<llo_original>
// kernel: transformer_block.3
$region0: #{transformer_block.3}
  #allocation0 [shape = 'u32[]', space=smem, size = 0x4, offset = 0x4, fixed_abs, tag = 'smem constant byte address 0x4 - core index']
  #allocation1 [shape = 'u32[72,128]{1,0:T(1,128)}', space=vmem, size = 0x9000, scoped, tag = 'internal scratch']
  #allocation2 [shape = 'bf16[8,32]{1,0:T(8,128)(2,1)}', space=vmem, size = 0x800, scoped, tag = 'scratch operand']
  #allocation3 [shape = 'f32[8,32]{1,0:T(8,128)}', space=vmem, size = 0x1000, scoped, tag = 'scratch operand']
  %s0 = inlined_call_operand.hbm [shape: f32[2,8,32], index: 0, kind: input, shape index: {}, may-alias: {0,5}]
  %s1 = inlined_call_operand.vmem [shape: f32[1,32], index: 1, kind: input, shape index: {}]
  %s2 = inlined_call_operand.vmem [shape: bf16[32,96], index: 2, kind: input, shape index: {}]
  %s3 = inlined_call_operand.vmem [shape: bf16[32,96], index: 3, kind: input, shape index: {}]
  %s4 = inlined_call_operand.vmem [shape: bf16[96,32], index: 4, kind: input, shape index: {}]
  %s5 = inlined_call_operand.hbm [shape: f32[2,8,32], index: 5, kind: output, shape index: {}, may-alias: {0,5}]
  %s6 = sld [smem:[#allocation0]]
  $region65: #{transformer_block.3} parent=0
    _
  %s8 = ssub.s32 1, %s6
  %s9 = scalar_select 0, %s8, %s6
  $region1: #{transformer_block.3} parent=0
    #allocation4 [shape = 'u8[8192]{0}', space=vmem, size = 0x2000, scoped, tag = 'input window, operand 0']
    #allocation5 [shape = 's32[2]{0}', space=sflag, size = 0x8, scoped, tag = 'scoped memory for transformer_block.3']
    #allocation6 [shape = 's32[2]{0}', space=sflag, size = 0x8, scoped, tag = 'scoped memory for transformer_block.3']
    #allocation7 [shape = 'u8[8192]{0}', space=vmem, size = 0x2000, scoped, tag = 'output window, operand 0']
    %10 = vsyncpa [#allocation5], 0
    %s11 = scalar_lea.sflag [#allocation5], 1
    %12 = vsyncpa %s11, 0
    %13 = vsyncpa [#allocation6], 0
    %s14 = scalar_lea.sflag [#allocation6], 1
    %15 = vsyncpa %s14, 0
    loop: start=0, step=1, limit=4
    $region2: #{transformer_block.3} parent=1 // loop_pre_header
      _
    $region3: #{transformer_block.3} parent=1 // loop_header
      %s17 = sphi 0, %s21
      %p18 = scmp.ge.s32.totalorder %s17, 4
      %s24 = sphi 0, %s43
      %s25 = sphi 0, %s39
      %s26 = sphi 0, %s35
      %s27 = sphi 0, %s24
      %s28 = sphi 0, %s25
      %s29 = sphi 0, %s26
      %s30 = sphi 0, %s27
      %s31 = sphi 0, %s28
      %s32 = sphi 0, %s29
      %s48 = sphi 0, %s50
      %s51 = sphi 0, %s48
      %s52 = sphi 0, %s51
      %s68 = sphi 0, %s52
      %s72 = sphi 0, %s72
      %s74 = sphi 0, %s72
      %s75 = sphi 0, %s74
      %s89 = sphi 0, %s75
      %s95 = sphi 0, %s97
      %s98 = sphi 0, %s95
      %s99 = sphi 0, %s98
      %s115 = sphi 0, %s99
      %s121 = sphi 0, %s123
      %s124 = sphi 0, %s121
      %s125 = sphi 0, %s124
      %s141 = sphi 0, %s125
      %s147 = sphi 0, %s149
      %s150 = sphi 0, %s147
      %s151 = sphi 0, %s150
      %s167 = sphi 0, %s151
      %s175 = sphi 0, %s177
      %s178 = sphi 0, %s175
      %s179 = sphi 0, %s178
      %s195 = sphi 0, %s179
    $region4: #{transformer_block.3} parent=1 // loop_header_branch
      %20 = sbr.rel (%p18) target = $region8
    $region5: #{transformer_block.3} parent=1 // loop_body
      %s22 = ssub.s32 %s17, 1
      %s23 = ssub.s32 %s17, 2
      %s33 = sadd.s32 1, %s26
      %p34 = scmp.ge.s32.totalorder %s33, 1
      %s35 = scalar_select %p34, 0, %s33
      %s36 = sadd.s32 1, %s25
      %s37 = scalar_select %p34, %s36, %s25
      %p38 = scmp.ge.s32.totalorder %s37, 1
      %s39 = scalar_select %p38, 0, %s37
      %s40 = sadd.s32 1, %s24
      %s41 = scalar_select %p38, %s40, %s24
      %p42 = scmp.ge.s32.totalorder %s41, 2
      %s43 = scalar_select %p42, 0, %s41
      %s44 = ssub.s32 %s24, %s43
      %s45 = ssub.s32 %s25, %s39
      %s46 = sor.u32 %s44, %s45
      %p47 = scmp.eq.s32.totalorder %s46, 0
      %s49 = sadd.s32 %s48, 1
      %s50 = scalar_select %p47, %s48, %s49
      %p53 = pneg %p47
      %p54 = scmp.eq.s32.totalorder %s17, 1
      %p55 = por %p53, %p54
      %p56 = scmp.ne.s32.totalorder %s48, %s51
      %p57 = scmp.eq.s32.totalorder %s17, 0
      %p58 = por %p56, %p57
      %p59 = scmp.ne.s32.totalorder %s48, %s51
      %p60 = scmp.eq.s32.totalorder %s22, 1
      %p61 = por %p59, %p60
      %p62 = scmp.ne.s32.totalorder %s51, %s52
      %p63 = scmp.eq.s32.totalorder %s22, 0
      %p64 = por %p62, %p63
      %p65 = scmp.ne.s32.totalorder %s51, %s52
      %p66 = scmp.eq.s32.totalorder %s23, 1
      %p67 = por %p65, %p66
      %p69 = scmp.ne.s32.totalorder %s52, %s68
      %p70 = scmp.eq.s32.totalorder %s23, 0
      %p71 = por %p69, %p70
      %s73 = sadd.s32 %s72, 1
      %p76 = scmp.eq.s32.totalorder %s17, 1
      %p77 = scmp.ne.s32.totalorder %s72, %s74
      %p78 = scmp.eq.s32.totalorder %s17, 0
      %p79 = por %p77, %p78
      %p80 = scmp.ne.s32.totalorder %s72, %s74
      %p81 = scmp.eq.s32.totalorder %s22, 1
      %p82 = por %p80, %p81
      %p83 = scmp.ne.s32.totalorder %s74, %s75
      %p84 = scmp.eq.s32.totalorder %s22, 0
      %p85 = por %p83, %p84
      %p86 = scmp.ne.s32.totalorder %s74, %s75
      %p87 = scmp.eq.s32.totalorder %s23, 1
      %p88 = por %p86, %p87
      %p90 = scmp.ne.s32.totalorder %s75, %s89
      %p91 = scmp.eq.s32.totalorder %s23, 0
      %p92 = por %p90, %p91
      %s93 = ssub.s32 %s26, %s35
      %p94 = scmp.eq.s32.totalorder %s93, 0
      %s96 = sadd.s32 %s95, 1
      %s97 = scalar_select %p94, %s95, %s96
      %p100 = pneg %p94
      %p101 = scmp.eq.s32.totalorder %s17, 1
      %p102 = por %p100, %p101
      %p103 = scmp.ne.s32.totalorder %s95, %s98
      %p104 = scmp.eq.s32.totalorder %s17, 0
      %p105 = por %p103, %p104
      %p106 = scmp.ne.s32.totalorder %s95, %s98
      %p107 = scmp.eq.s32.totalorder %s22, 1
      %p108 = por %p106, %p107
      %p109 = scmp.ne.s32.totalorder %s98, %s99
      %p110 = scmp.eq.s32.totalorder %s22, 0
      %p111 = por %p109, %p110
      %p112 = scmp.ne.s32.totalorder %s98, %s99
      %p113 = scmp.eq.s32.totalorder %s23, 1
      %p114 = por %p112, %p113
      %p116 = scmp.ne.s32.totalorder %s99, %s115
      %p117 = scmp.eq.s32.totalorder %s23, 0
      %p118 = por %p116, %p117
      %s119 = ssub.s32 %s26, %s35
      %p120 = scmp.eq.s32.totalorder %s119, 0
      %s122 = sadd.s32 %s121, 1
      %s123 = scalar_select %p120, %s121, %s122
      %p126 = pneg %p120
      %p127 = scmp.eq.s32.totalorder %s17, 1
      %p128 = por %p126, %p127
      %p129 = scmp.ne.s32.totalorder %s121, %s124
      %p130 = scmp.eq.s32.totalorder %s17, 0
      %p131 = por %p129, %p130
      %p132 = scmp.ne.s32.totalorder %s121, %s124
      %p133 = scmp.eq.s32.totalorder %s22, 1
      %p134 = por %p132, %p133
      %p135 = scmp.ne.s32.totalorder %s124, %s125
      %p136 = scmp.eq.s32.totalorder %s22, 0
      %p137 = por %p135, %p136
      %p138 = scmp.ne.s32.totalorder %s124, %s125
      %p139 = scmp.eq.s32.totalorder %s23, 1
      %p140 = por %p138, %p139
      %p142 = scmp.ne.s32.totalorder %s125, %s141
      %p143 = scmp.eq.s32.totalorder %s23, 0
      %p144 = por %p142, %p143
      %s145 = ssub.s32 %s26, %s35
      %p146 = scmp.eq.s32.totalorder %s145, 0
      %s148 = sadd.s32 %s147, 1
      %s149 = scalar_select %p146, %s147, %s148
      %p152 = pneg %p146
      %p153 = scmp.eq.s32.totalorder %s17, 1
      %p154 = por %p152, %p153
      %p155 = scmp.ne.s32.totalorder %s147, %s150
      %p156 = scmp.eq.s32.totalorder %s17, 0
      %p157 = por %p155, %p156
      %p158 = scmp.ne.s32.totalorder %s147, %s150
      %p159 = scmp.eq.s32.totalorder %s22, 1
      %p160 = por %p158, %p159
      %p161 = scmp.ne.s32.totalorder %s150, %s151
      %p162 = scmp.eq.s32.totalorder %s22, 0
      %p163 = por %p161, %p162
      %p164 = scmp.ne.s32.totalorder %s150, %s151
      %p165 = scmp.eq.s32.totalorder %s23, 1
      %p166 = por %p164, %p165
      %p168 = scmp.ne.s32.totalorder %s151, %s167
      %p169 = scmp.eq.s32.totalorder %s23, 0
      %p170 = por %p168, %p169
      %s171 = ssub.s32 %s24, %s43
      %s172 = ssub.s32 %s25, %s39
      %s173 = sor.u32 %s171, %s172
      %p174 = scmp.eq.s32.totalorder %s173, 0
      %s176 = sadd.s32 %s175, 1
      %s177 = scalar_select %p174, %s175, %s176
      %p180 = pneg %p174
      %p181 = scmp.eq.s32.totalorder %s17, 1
      %p182 = por %p180, %p181
      %p183 = scmp.ne.s32.totalorder %s175, %s178
      %p184 = scmp.eq.s32.totalorder %s17, 0
      %p185 = por %p183, %p184
      %p186 = scmp.ne.s32.totalorder %s175, %s178
      %p187 = scmp.eq.s32.totalorder %s22, 1
      %p188 = por %p186, %p187
      %p189 = scmp.ne.s32.totalorder %s178, %s179
      %p190 = scmp.eq.s32.totalorder %s22, 0
      %p191 = por %p189, %p190
      %p192 = scmp.ne.s32.totalorder %s178, %s179
      %p193 = scmp.eq.s32.totalorder %s23, 1
      %p194 = por %p192, %p193
      %p196 = scmp.ne.s32.totalorder %s179, %s195
      %p197 = scmp.eq.s32.totalorder %s23, 0
      %p198 = por %p196, %p197
      %p199 = scmp.le.s32.totalorder 1, %s17
      %p200 = scmp.lt.s32.totalorder %s17, 3
      %p201 = pnand %p199, %p200
      %p202 = pneg %p201
      // Predicated region
      $region9: #{transformer_block.3} parent=5 // pred_check
        _
      $region10: #{transformer_block.3} parent=5 // pred_check_branch
        %204 = sbr.rel (%p201) target = $region12
      $region11: #{transformer_block.3} parent=5 // pred_region
        %s205 = ssub.s32 %s17, 1
        // Predicated region
        $region13: #{transformer_block.3} parent=11 // pred_check
          %p206 = pneg %p85
        $region14: #{transformer_block.3} parent=11 // pred_check_branch
          %208 = sbr.rel (%p206) target = $region16
        $region15: #{transformer_block.3} parent=11 // pred_region
          _
        $region16: #{transformer_block.3} parent=11 // pred_fallthru
          _
        // Predicated region
        $region17: #{transformer_block.3} parent=11 // pred_check
          %p209 = pneg %p111
        $region18: #{transformer_block.3} parent=11 // pred_check_branch
          %211 = sbr.rel (%p209) target = $region20
        $region19: #{transformer_block.3} parent=11 // pred_region
          %p212 = scmp.lt.s32.totalorder %s29, 0
          %s213 = scalar_select %p212, %s29, 0
          %s214 = smul.addr %s213, 4
          %s215 = scalar_lea.vmem %s2, %s214
        $region20: #{transformer_block.3} parent=11 // pred_fallthru
          _
        // Predicated region
        $region21: #{transformer_block.3} parent=11 // pred_check
          %p216 = pneg %p137
        $region22: #{transformer_block.3} parent=11 // pred_check_branch
          %218 = sbr.rel (%p216) target = $region24
        $region23: #{transformer_block.3} parent=11 // pred_region
          %p219 = scmp.lt.s32.totalorder %s29, 0
          %s220 = scalar_select %p219, %s29, 0
          %s221 = smul.addr %s220, 4
          %s222 = scalar_lea.vmem %s3, %s221
        $region24: #{transformer_block.3} parent=11 // pred_fallthru
          _
        // Predicated region
        $region25: #{transformer_block.3} parent=11 // pred_check
          %p223 = pneg %p163
        $region26: #{transformer_block.3} parent=11 // pred_check_branch
          %225 = sbr.rel (%p223) target = $region28
        $region27: #{transformer_block.3} parent=11 // pred_region
          %s226 = smul.u32 12, %s29
          %p227 = scmp.lt.s32.totalorder %s226, 11
          %s228 = scalar_select %p227, %s226, 11
          %s229 = smul.addr %s228, 4
          %s230 = scalar_lea.vmem %s4, %s229
          %s231 = smul.u32 12, %s29
        $region28: #{transformer_block.3} parent=11 // pred_fallthru
          _
      $region12: #{transformer_block.3} parent=5 // pred_fallthru
        _
      %p232 = scmp.lt.s32.totalorder %s17, 2
      // Predicated region
      $region29: #{transformer_block.3} parent=5 // pred_check
        %p233 = pneg %p232
      $region30: #{transformer_block.3} parent=5 // pred_check_branch
        %235 = sbr.rel (%p233) target = $region32
      $region31: #{transformer_block.3} parent=5 // pred_region
        // Predicated region
        $region33: #{transformer_block.3} parent=31 // pred_check
          %p236 = pneg %p58
        $region34: #{transformer_block.3} parent=31 // pred_check_branch
          %238 = sbr.rel (%p236) target = $region36
        $region35: #{transformer_block.3} parent=31 // pred_region
          %s239 = sand.u32 %s48, 1
          %s240 = scalar_lea.sflag [#allocation5], %s239
          %s241 = sand.u32 %s48, 1
          %s242 = smul.addr %s241, 8
          %s243 = scalar_lea.vmem [#allocation4], %s242
          %245 = vsyncadd %s240, 0
          %s246 = sadd.s32 %s25, %s24
          %s247 = smul.addr %s246, 8
          %s248 = scalar_lea.hbm %s0, %s247
          %s250 = sshll.u32 %s248, 4
          %s251 = int_to_ptr.hbm [resolvable:$true] %s250
          %s252 = sshll.u32 %s243, 4
          %s253 = int_to_ptr.vmem [resolvable:$true] %s252
          %255 = dma.hbm_to_vmem [thread:$0]  %s251, 128, %s253, %s240
        $region36: #{transformer_block.3} parent=31 // pred_fallthru
          _
      $region32: #{transformer_block.3} parent=5 // pred_fallthru
        _
      %p256 = scmp.le.s32.totalorder 1, %s17
      %p257 = scmp.lt.s32.totalorder %s17, 3
      %p258 = pnand %p256, %p257
      %p259 = pneg %p258
      // Predicated region
      $region37: #{transformer_block.3} parent=5 // pred_check
        _
      $region38: #{transformer_block.3} parent=5 // pred_check_branch
        %261 = sbr.rel (%p258) target = $region40
      $region39: #{transformer_block.3} parent=5 // pred_region
        %s262 = ssub.s32 %s17, 1
        %s263 = sand.u32 %s51, 1
        %s264 = scalar_lea.sflag [#allocation5], %s263
        %s265 = sand.u32 %s51, 1
        %s266 = smul.addr %s265, 8
        %s267 = scalar_lea.vmem [#allocation4], %s266
        // Predicated region
        $region41: #{transformer_block.3} parent=39 // pred_check
          %p268 = pneg %p64
        $region42: #{transformer_block.3} parent=39 // pred_check_branch
          %270 = sbr.rel (%p268) target = $region44
        $region43: #{transformer_block.3} parent=39 // pred_region
          %272 = dma.done %s264, 128
        $region44: #{transformer_block.3} parent=39 // pred_fallthru
          _
        %s273 = sand.u32 %s51, 1
        %s274 = scalar_lea.sflag [#allocation5], %s273
        %s275 = sand.u32 %s51, 1
        %s276 = smul.addr %s275, 8
        %s277 = scalar_lea.vmem [#allocation4], %s276
        %p278 = pneg %p64
        %p279 = pneg %p61
        %p280 = pneg %p85
        %p281 = pneg %p82
        %p282 = scmp.lt.s32.totalorder %s29, 0
        %s283 = scalar_select %p282, %s29, 0
        %s284 = smul.addr %s283, 4
        %s285 = scalar_lea.vmem %s2, %s284
        %p286 = pneg %p111
        %p287 = pneg %p108
        %p288 = scmp.lt.s32.totalorder %s29, 0
        %s289 = scalar_select %p288, %s29, 0
        %s290 = smul.addr %s289, 4
        %s291 = scalar_lea.vmem %s3, %s290
        %p292 = pneg %p137
        %p293 = pneg %p134
        %s294 = smul.u32 12, %s29
        %p295 = scmp.lt.s32.totalorder %s294, 11
        %s296 = scalar_select %p295, %s294, 11
        %s297 = smul.addr %s296, 4
        %s298 = scalar_lea.vmem %s4, %s297
        %p299 = pneg %p163
        %p300 = pneg %p160
        %p301 = pneg %p191
        %p302 = pneg %p188
        %s303 = sand.u32 %s178, 1
        %s304 = scalar_lea.sflag [#allocation6], %s303
        %s305 = sand.u32 %s178, 1
        %s306 = smul.addr %s305, 8
        %s307 = scalar_lea.vmem [#allocation7], %s306
        %p308 = scmp.lt.s32.totalorder %s29, 0
        %s309 = scalar_select %p308, %s29, 0
        %s310 = smul.addr %s309, 4
        %s311 = scalar_lea.vmem %s2, %s310
        %p312 = scmp.lt.s32.totalorder %s29, 0
        %s313 = scalar_select %p312, %s29, 0
        %s314 = smul.addr %s313, 4
        %s315 = scalar_lea.vmem %s3, %s314
        %s316 = smul.u32 12, %s29
        %p317 = scmp.lt.s32.totalorder %s316, 11
        %s318 = scalar_select %p317, %s316, 11
        %s319 = smul.addr %s318, 4
        %s320 = scalar_lea.vmem %s4, %s319
        %s321 = smul.u32 12, %s29
        %p323 = scmp.eq.s32.totalorder %s29, 0
        // Predicated region
        $region45: #{transformer_block.3} parent=39 // pred_check
          %p324 = pneg %p323
        $region46: #{transformer_block.3} parent=39 // pred_check_branch
          %326 = sbr.rel (%p324) target = $region48
        $region47: #{transformer_block.3} parent=39 // pred_region
          %v327 = vld [vmem:[%s267] sm:$0xff]
          %v328 = vld [vmem:[%s1] sm:$0x1]
          %v329 = vmul.f32 %v327, %v327
          %vm330 = vcmask 261120
          %v331 = vsel %vm330, %v329, 0.0
          %332 = vadd.xlane.f32.xlu0 %v331
          %v333 = vpop.xlane.xlu0 %332
          %v334 = vrcp.pop 32.0
          %v335 = vmul.f32 32.0, %v334
          %v336 = vsub.f32 1.0, %v335
          %v337 = vmul.f32 %v334, %v336
          %v338 = vadd.f32 %v334, %v337
          %vm339 = vweird.f32 %v334
          %v340 = vsel %vm339, %v334, %v338
          %v341 = vmul.f32 %v333, %v340
          %v342 = vadd.f32 %v341, 1e-05
          %v343 = vrsqrt.pop %v342
          %v344 = vmul.f32 %v343, %v342
          %v345 = vmul.f32 %v344, %v343
          %v346 = vmul.f32 0.5, %v345
          %v347 = vsub.f32 1.5, %v346
          %v348 = vmul.f32 %v343, %v347
          %vm349 = vweird.f32 %v342
          %vm350 = vweird.f32 %v343
          %vm351 = vmor %vm349, %vm350
          %v352 = vsel %vm351, %v343, %v348
          %v353 = vmul.f32 %v327, %v352
          %v355 = vperm.slane %v328, 0
          %v357 = vmul.f32 %v353, %v355
          %v358 = vpack.c.bf16 %v357, %v357
          %vm359 = vcmask 257024
          %360 = vst.msk [vmem:[#allocation2] sm:$0xf] %vm359, %v358
          %361 = vst.msk [vmem:[#allocation3] sm:$0xff] %vm330, 0.0
        $region48: #{transformer_block.3} parent=39 // pred_fallthru
          _
        %v362 = vld [vmem:[#allocation2] sm:$0xf]
        %v363 = vld [vmem:[%s311] sm:$0xf]
        %v364 = vld [vmem:[%s311 + $0x4] sm:$0xf]
        %v365 = vld [vmem:[%s311 + $0x8] sm:$0xf]
        %v366 = vld [vmem:[%s311 + $0xc] sm:$0xf]
        %v371 = vunpack.c.l.b16 %v363
        %v372 = vunpack.c.l.b16 %v364
        %v373 = vunpack.c.l.b16 %v365
        %v374 = vunpack.c.l.b16 %v366
        %v375 = vpack.c.b16 %v372, %v371
        %v376 = vpack.c.b16 %v374, %v373
        %vm379 = vcmask 261120
        %v381 = vsel %vm379, %v362, 0
        %383 = vmatpush.bf16.msra.mxu0 0
        %384 = vmatpush.bf16.msra.mxu0 0
        %385 = vmatpush.bf16.msra.mxu0 0
        %386 = vmatpush.bf16.msra.mxu0 0
        %387 = vmatpush.bf16.msra.mxu0 0
        %388 = vmatpush.bf16.msra.mxu0 0
        %389 = vmatpush.bf16.msra.mxu0 %v376
        %390 = vmatpush.bf16.msra.mxu0 %v375
        %391 = vmatmul.bf16.gmra.mxu0 %v381
        %v392 = vpop.f32.mrf.mxu0
        %v393 = vadd.f32 0.0, %v392
        %v394 = vpop.f32.mrf.mxu0
        %395 = vdwg.mxu0
        %v396 = vld [vmem:[%s315] sm:$0xf]
        %v397 = vld [vmem:[%s315 + $0x4] sm:$0xf]
        %v398 = vld [vmem:[%s315 + $0x8] sm:$0xf]
        %v399 = vld [vmem:[%s315 + $0xc] sm:$0xf]
        %v404 = vunpack.c.l.b16 %v396
        %v405 = vunpack.c.l.b16 %v397
        %v406 = vunpack.c.l.b16 %v398
        %v407 = vunpack.c.l.b16 %v399
        %v408 = vpack.c.b16 %v405, %v404
        %v409 = vpack.c.b16 %v407, %v406
        %412 = vmatpush.bf16.msra.mxu0 0
        %413 = vmatpush.bf16.msra.mxu0 0
        %414 = vmatpush.bf16.msra.mxu0 0
        %415 = vmatpush.bf16.msra.mxu0 0
        %416 = vmatpush.bf16.msra.mxu0 0
        %417 = vmatpush.bf16.msra.mxu0 0
        %418 = vmatpush.bf16.msra.mxu0 %v409
        %419 = vmatpush.bf16.msra.mxu0 %v408
        %420 = vmatmul.bf16.gmra.mxu0 %v381
        %v421 = vpop.f32.mrf.mxu0
        %v422 = vadd.f32 0.0, %v421
        %v423 = vpop.f32.mrf.mxu0
        %424 = vdwg.mxu0
        %v425 = vxor.u32 %v393, 2147483648
        %v426 = vmul.f32 %v425, 1.442695
        %v427 = vpow.pop %v426
        %v428 = vadd.f32 %v427, 1.0
        %v429 = vrcp.pop %v428
        %v430 = vmul.f32 %v428, %v429
        %v431 = vsub.f32 1.0, %v430
        %v432 = vmul.f32 %v429, %v431
        %v433 = vadd.f32 %v429, %v432
        %vm434 = vweird.f32 %v428
        %vm435 = vweird.f32 %v429
        %vm436 = vmor %vm434, %vm435
        %v437 = vsel %vm436, %v429, %v433
        %v438 = vand.u32 2147483647, %v428
        %vm439 = vcmp.eq.f32.partialorder %v438, 8.507059e+37
        %v440 = vand.u32 %v428, 2147483648
        %v441 = vor.u32 1.1754944e-38, %v440
        %v442 = vsel %vm439, %v441, %v437
        %v443 = vmul.f32 1.0, %v442
        %v444 = vmul.f32 %v393, %v443
        %v445 = vmul.f32 %v444, %v422
        %v446 = vld [vmem:[#allocation3] sm:$0xff]
        %v447 = vpack.c.bf16 %v445, %v445
        %v448 = vld [vmem:[%s320] sm:$0xf]
        %v449 = vld [vmem:[%s320 + $0x4] sm:$0xf]
        %v450 = vld [vmem:[%s320 + $0x8] sm:$0xf]
        %v451 = vld [vmem:[%s320 + $0xc] sm:$0xf]
        %v452 = vld [vmem:[%s320 + $0x10] sm:$0xf]
        %v453 = vld [vmem:[%s320 + $0x14] sm:$0xf]
        %v454 = vld [vmem:[%s320 + $0x18] sm:$0xf]
        %v455 = vld [vmem:[%s320 + $0x1c] sm:$0xf]
        %v456 = vld [vmem:[%s320 + $0x20] sm:$0xf]
        %v457 = vld [vmem:[%s320 + $0x24] sm:$0xf]
        %v458 = vld [vmem:[%s320 + $0x28] sm:$0xf]
        %v459 = vld [vmem:[%s320 + $0x2c] sm:$0xf]
        %v472 = vunpack.c.l.b16 %v448
        %v473 = vunpack.c.l.b16 %v449
        %v474 = vunpack.c.l.b16 %v450
        %v475 = vunpack.c.l.b16 %v451
        %v476 = vunpack.c.l.b16 %v452
        %v477 = vunpack.c.l.b16 %v453
        %v478 = vunpack.c.l.b16 %v454
        %v479 = vunpack.c.l.b16 %v455
        %v480 = vunpack.c.l.b16 %v456
        %v481 = vunpack.c.l.b16 %v457
        %v482 = vunpack.c.l.b16 %v458
        %v483 = vunpack.c.l.b16 %v459
        %v484 = vpack.c.b16 %v473, %v472
        %v485 = vpack.c.b16 %v475, %v474
        %v486 = vpack.c.b16 %v477, %v476
        %v487 = vpack.c.b16 %v479, %v478
        %v488 = vpack.c.b16 %v481, %v480
        %v489 = vpack.c.b16 %v483, %v482
        %vm496 = vcmask 785408
        %v498 = vsel %vm496, %v447, 0
        %500 = vmatpush.bf16.msra.mxu0 0
        %501 = vmatpush.bf16.msra.mxu0 0
        %502 = vmatpush.bf16.msra.mxu0 %v489
        %503 = vmatpush.bf16.msra.mxu0 %v488
        %504 = vmatpush.bf16.msra.mxu0 %v487
        %505 = vmatpush.bf16.msra.mxu0 %v486
        %506 = vmatpush.bf16.msra.mxu0 %v485
        %507 = vmatpush.bf16.msra.mxu0 %v484
        %508 = vmatmul.bf16.gmra.mxu0 %v498
        %v509 = vpop.f32.mrf.mxu0
        %v510 = vadd.f32 0.0, %v509
        %v511 = vpop.f32.mrf.mxu0
        %512 = vdwg.mxu0
        %v513 = vadd.f32 %v446, %v510
        %514 = vst.msk [vmem:[#allocation3] sm:$0xff] %vm379, %v513
        // Predicated region
        $region49: #{transformer_block.3} parent=39 // pred_check
          %p515 = pneg %p323
        $region50: #{transformer_block.3} parent=39 // pred_check_branch
          %517 = sbr.rel (%p515) target = $region52
        $region51: #{transformer_block.3} parent=39 // pred_region
          %v518 = vld [vmem:[%s267] sm:$0xff]
          %v519 = vld [vmem:[#allocation3] sm:$0xff]
          %v520 = vadd.f32 %v518, %v519
          %521 = vst.msk [vmem:[%s307] sm:$0xff] %vm379, %v520
        $region52: #{transformer_block.3} parent=39 // pred_fallthru
          _
        %s522 = sand.u32 %s178, 1
        %s523 = scalar_lea.sflag [#allocation6], %s522
        %s524 = sand.u32 %s178, 1
        %s525 = smul.addr %s524, 8
        %s526 = scalar_lea.vmem [#allocation7], %s525
        // Predicated region
        $region53: #{transformer_block.3} parent=39 // pred_check
          %p527 = pneg %p188
        $region54: #{transformer_block.3} parent=39 // pred_check_branch
          %529 = sbr.rel (%p527) target = $region56
        $region55: #{transformer_block.3} parent=39 // pred_region
          %531 = vsyncadd %s523, 0
          %s532 = sadd.s32 %s28, %s27
          %s533 = smul.addr %s532, 8
          %s534 = scalar_lea.hbm %s5, %s533
          %s536 = sshll.u32 %s526, 4
          %s537 = int_to_ptr.vmem [resolvable:$true] %s536
          %s538 = sshll.u32 %s534, 4
          %s539 = int_to_ptr.hbm [resolvable:$true] %s538
          %541 = dma.vmem_to_hbm [thread:$0]  %s537, 128, %s539, %s523
        $region56: #{transformer_block.3} parent=39 // pred_fallthru
          _
      $region40: #{transformer_block.3} parent=5 // pred_fallthru
        _
      %p542 = scmp.le.s32.totalorder 2, %s17
      // Predicated region
      $region57: #{transformer_block.3} parent=5 // pred_check
        %p543 = pneg %p542
      $region58: #{transformer_block.3} parent=5 // pred_check_branch
        %545 = sbr.rel (%p543) target = $region60
      $region59: #{transformer_block.3} parent=5 // pred_region
        %s546 = ssub.s32 %s17, 2
        // Predicated region
        $region61: #{transformer_block.3} parent=59 // pred_check
          %p547 = pneg %p194
        $region62: #{transformer_block.3} parent=59 // pred_check_branch
          %549 = sbr.rel (%p547) target = $region64
        $region63: #{transformer_block.3} parent=59 // pred_region
          %s550 = sand.u32 %s179, 1
          %s551 = scalar_lea.sflag [#allocation6], %s550
          %s552 = sand.u32 %s179, 1
          %s553 = smul.addr %s552, 8
          %s554 = scalar_lea.vmem [#allocation7], %s553
          %556 = dma.done %s551, 128
        $region64: #{transformer_block.3} parent=59 // pred_fallthru
          _
      $region60: #{transformer_block.3} parent=5 // pred_fallthru
        _
    $region6: #{transformer_block.3} parent=1 // loop_footer
      %s21 = sadd.s32 1, %s17
    $region7: #{transformer_block.3} parent=1 // loop_footer_branch
      %16 = sbr.rel target = $region3
    $region8: #{transformer_block.3} parent=1 // loop_exit
      _
    %557 = vsyncpa [#allocation5], 1
    %s558 = scalar_lea.sflag [#allocation5], 1
    %559 = vsyncpa %s558, 1
    %560 = vsyncpa [#allocation6], 1
    %s561 = scalar_lea.sflag [#allocation6], 1
    %562 = vsyncpa %s561, 1

// kernel: transformer_block.2
$region0: #{transformer_block.2}
  #allocation0 [shape = 'u32[]', space=smem, size = 0x4, offset = 0x4, fixed_abs, tag = 'smem constant byte address 0x4 - core index']
  #allocation1 [shape = 'u32[72,128]{1,0:T(1,128)}', space=vmem, size = 0x9000, scoped, tag = 'internal scratch']
  #allocation2 [shape = 'bf16[8,32]{1,0:T(8,128)(2,1)}', space=vmem, size = 0x800, scoped, tag = 'scratch operand']
  #allocation3 [shape = 'bf16[8,32]{1,0:T(8,128)(2,1)}', space=vmem, size = 0x800, scoped, tag = 'scratch operand']
  #allocation4 [shape = 'bf16[8,32]{1,0:T(8,128)(2,1)}', space=vmem, size = 0x800, scoped, tag = 'scratch operand']
  %s0 = inlined_call_operand.hbm [shape: f32[2,8,32], index: 0, kind: input, shape index: {}]
  %s1 = inlined_call_operand.hbm [shape: f32[1,32], index: 1, kind: input, shape index: {}]
  %s2 = inlined_call_operand.hbm [shape: bf16[32,32], index: 2, kind: input, shape index: {}]
  %s3 = inlined_call_operand.hbm [shape: bf16[32,64], index: 3, kind: input, shape index: {}]
  %s4 = inlined_call_operand.hbm [shape: bf16[32,32], index: 4, kind: input, shape index: {}]
  %s5 = inlined_call_operand.vmem [shape: f32[8,32], index: 5, kind: input, shape index: {}]
  %s6 = inlined_call_operand.hbm [shape: f32[8,32], index: 6, kind: input, shape index: {}]
  %s7 = inlined_call_operand.hbm [shape: f32[2,8,32], index: 7, kind: output, shape index: {}]
  %s8 = sld [smem:[#allocation0]]
  $region117: #{transformer_block.2} parent=0
    _
  %s10 = ssub.s32 1, %s8
  %s11 = scalar_select 0, %s10, %s8
  $region1: #{transformer_block.2} parent=0
    #allocation5 [shape = 'u8[8192]{0}', space=vmem, size = 0x2000, scoped, tag = 'input window, operand 0']
    #allocation6 [shape = 's32[2]{0}', space=sflag, size = 0x8, scoped, tag = 'scoped memory for transformer_block.2']
    #allocation7 [shape = 's32[2]{0}', space=sflag, size = 0x8, scoped, tag = 'scoped memory for transformer_block.2']
    #allocation8 [shape = 'u8[512]{0}', space=vmem, size = 0x400, scoped, tag = 'input window, operand 1, single buffered']
    #allocation9 [shape = 's32[1]{0}', space=sflag, size = 0x4, scoped, tag = 'scoped memory for transformer_block.2']
    #allocation10 [shape = 'u8[8192]{0}', space=vmem, size = 0x2000, scoped, tag = 'input window, operand 2, single buffered']
    #allocation11 [shape = 'u8[8192]{0}', space=vmem, size = 0x2000, scoped, tag = 'input window, operand 3, single buffered']
    #allocation12 [shape = 's32[1]{0}', space=sflag, size = 0x4, scoped, tag = 'scoped memory for transformer_block.2']
    #allocation13 [shape = 'u8[8192]{0}', space=vmem, size = 0x2000, scoped, tag = 'input window, operand 4, single buffered']
    #allocation14 [shape = 'u8[4096]{0}', space=vmem, size = 0x1000, scoped, tag = 'input window, operand 6, single buffered']
    #allocation15 [shape = 's32[1]{0}', space=sflag, size = 0x4, scoped, tag = 'scoped memory for transformer_block.2']
    #allocation16 [shape = 'u8[8192]{0}', space=vmem, size = 0x2000, scoped, tag = 'output window, operand 0']
    %12 = vsyncpa [#allocation6], 0
    %s13 = scalar_lea.sflag [#allocation6], 1
    %14 = vsyncpa %s13, 0
    %15 = vsyncpa [#allocation9], 0
    %16 = vsyncpa [#allocation12], 0
    %17 = vsyncpa [#allocation15], 0
    %18 = vsyncpa [#allocation7], 0
    %s19 = scalar_lea.sflag [#allocation7], 1
    %20 = vsyncpa %s19, 0
    loop: start=0, step=1, limit=4
    $region2: #{transformer_block.2} parent=1 // loop_pre_header
      _
    $region3: #{transformer_block.2} parent=1 // loop_header
      %s22 = sphi 0, %s26
      %p23 = scmp.ge.s32.totalorder %s22, 4
      %s29 = sphi 0, %s41
      %s30 = sphi 0, %s37
      %s31 = sphi 0, %s29
      %s32 = sphi 0, %s30
      %s33 = sphi 0, %s31
      %s34 = sphi 0, %s32
      %s44 = sphi 0, %s46
      %s47 = sphi 0, %s44
      %s48 = sphi 0, %s47
      %s64 = sphi 0, %s48
      %s68 = sphi 0, %s68
      %s70 = sphi 0, %s68
      %s71 = sphi 0, %s70
      %s85 = sphi 0, %s71
      %s89 = sphi 0, %s89
      %s91 = sphi 0, %s89
      %s92 = sphi 0, %s91
      %s106 = sphi 0, %s92
      %s110 = sphi 0, %s110
      %s112 = sphi 0, %s110
      %s113 = sphi 0, %s112
      %s127 = sphi 0, %s113
      %s131 = sphi 0, %s131
      %s133 = sphi 0, %s131
      %s134 = sphi 0, %s133
      %s148 = sphi 0, %s134
      %s152 = sphi 0, %s152
      %s154 = sphi 0, %s152
      %s155 = sphi 0, %s154
      %s169 = sphi 0, %s155
      %s173 = sphi 0, %s173
      %s175 = sphi 0, %s173
      %s176 = sphi 0, %s175
      %s190 = sphi 0, %s176
      %s198 = sphi 0, %s200
      %s201 = sphi 0, %s198
      %s202 = sphi 0, %s201
      %s218 = sphi 0, %s202
    $region4: #{transformer_block.2} parent=1 // loop_header_branch
      %25 = sbr.rel (%p23) target = $region8
    $region5: #{transformer_block.2} parent=1 // loop_body
      %s27 = ssub.s32 %s22, 1
      %s28 = ssub.s32 %s22, 2
      %s35 = sadd.s32 1, %s30
      %p36 = scmp.ge.s32.totalorder %s35, 1
      %s37 = scalar_select %p36, 0, %s35
      %s38 = sadd.s32 1, %s29
      %s39 = scalar_select %p36, %s38, %s29
      %p40 = scmp.ge.s32.totalorder %s39, 2
      %s41 = scalar_select %p40, 0, %s39
      %s42 = ssub.s32 %s29, %s41
      %p43 = scmp.eq.s32.totalorder %s42, 0
      %s45 = sadd.s32 %s44, 1
      %s46 = scalar_select %p43, %s44, %s45
      %p49 = pneg %p43
      %p50 = scmp.eq.s32.totalorder %s22, 1
      %p51 = por %p49, %p50
      %p52 = scmp.ne.s32.totalorder %s44, %s47
      %p53 = scmp.eq.s32.totalorder %s22, 0
      %p54 = por %p52, %p53
      %p55 = scmp.ne.s32.totalorder %s44, %s47
      %p56 = scmp.eq.s32.totalorder %s27, 1
      %p57 = por %p55, %p56
      %p58 = scmp.ne.s32.totalorder %s47, %s48
      %p59 = scmp.eq.s32.totalorder %s27, 0
      %p60 = por %p58, %p59
      %p61 = scmp.ne.s32.totalorder %s47, %s48
      %p62 = scmp.eq.s32.totalorder %s28, 1
      %p63 = por %p61, %p62
      %p65 = scmp.ne.s32.totalorder %s48, %s64
      %p66 = scmp.eq.s32.totalorder %s28, 0
      %p67 = por %p65, %p66
      %s69 = sadd.s32 %s68, 1
      %p72 = scmp.eq.s32.totalorder %s22, 1
      %p73 = scmp.ne.s32.totalorder %s68, %s70
      %p74 = scmp.eq.s32.totalorder %s22, 0
      %p75 = por %p73, %p74
      %p76 = scmp.ne.s32.totalorder %s68, %s70
      %p77 = scmp.eq.s32.totalorder %s27, 1
      %p78 = por %p76, %p77
      %p79 = scmp.ne.s32.totalorder %s70, %s71
      %p80 = scmp.eq.s32.totalorder %s27, 0
      %p81 = por %p79, %p80
      %p82 = scmp.ne.s32.totalorder %s70, %s71
      %p83 = scmp.eq.s32.totalorder %s28, 1
      %p84 = por %p82, %p83
      %p86 = scmp.ne.s32.totalorder %s71, %s85
      %p87 = scmp.eq.s32.totalorder %s28, 0
      %p88 = por %p86, %p87
      %s90 = sadd.s32 %s89, 1
      %p93 = scmp.eq.s32.totalorder %s22, 1
      %p94 = scmp.ne.s32.totalorder %s89, %s91
      %p95 = scmp.eq.s32.totalorder %s22, 0
      %p96 = por %p94, %p95
      %p97 = scmp.ne.s32.totalorder %s89, %s91
      %p98 = scmp.eq.s32.totalorder %s27, 1
      %p99 = por %p97, %p98
      %p100 = scmp.ne.s32.totalorder %s91, %s92
      %p101 = scmp.eq.s32.totalorder %s27, 0
      %p102 = por %p100, %p101
      %p103 = scmp.ne.s32.totalorder %s91, %s92
      %p104 = scmp.eq.s32.totalorder %s28, 1
      %p105 = por %p103, %p104
      %p107 = scmp.ne.s32.totalorder %s92, %s106
      %p108 = scmp.eq.s32.totalorder %s28, 0
      %p109 = por %p107, %p108
      %s111 = sadd.s32 %s110, 1
      %p114 = scmp.eq.s32.totalorder %s22, 1
      %p115 = scmp.ne.s32.totalorder %s110, %s112
      %p116 = scmp.eq.s32.totalorder %s22, 0
      %p117 = por %p115, %p116
      %p118 = scmp.ne.s32.totalorder %s110, %s112
      %p119 = scmp.eq.s32.totalorder %s27, 1
      %p120 = por %p118, %p119
      %p121 = scmp.ne.s32.totalorder %s112, %s113
      %p122 = scmp.eq.s32.totalorder %s27, 0
      %p123 = por %p121, %p122
      %p124 = scmp.ne.s32.totalorder %s112, %s113
      %p125 = scmp.eq.s32.totalorder %s28, 1
      %p126 = por %p124, %p125
      %p128 = scmp.ne.s32.totalorder %s113, %s127
      %p129 = scmp.eq.s32.totalorder %s28, 0
      %p130 = por %p128, %p129
      %s132 = sadd.s32 %s131, 1
      %p135 = scmp.eq.s32.totalorder %s22, 1
      %p136 = scmp.ne.s32.totalorder %s131, %s133
      %p137 = scmp.eq.s32.totalorder %s22, 0
      %p138 = por %p136, %p137
      %p139 = scmp.ne.s32.totalorder %s131, %s133
      %p140 = scmp.eq.s32.totalorder %s27, 1
      %p141 = por %p139, %p140
      %p142 = scmp.ne.s32.totalorder %s133, %s134
      %p143 = scmp.eq.s32.totalorder %s27, 0
      %p144 = por %p142, %p143
      %p145 = scmp.ne.s32.totalorder %s133, %s134
      %p146 = scmp.eq.s32.totalorder %s28, 1
      %p147 = por %p145, %p146
      %p149 = scmp.ne.s32.totalorder %s134, %s148
      %p150 = scmp.eq.s32.totalorder %s28, 0
      %p151 = por %p149, %p150
      %s153 = sadd.s32 %s152, 1
      %p156 = scmp.eq.s32.totalorder %s22, 1
      %p157 = scmp.ne.s32.totalorder %s152, %s154
      %p158 = scmp.eq.s32.totalorder %s22, 0
      %p159 = por %p157, %p158
      %p160 = scmp.ne.s32.totalorder %s152, %s154
      %p161 = scmp.eq.s32.totalorder %s27, 1
      %p162 = por %p160, %p161
      %p163 = scmp.ne.s32.totalorder %s154, %s155
      %p164 = scmp.eq.s32.totalorder %s27, 0
      %p165 = por %p163, %p164
      %p166 = scmp.ne.s32.totalorder %s154, %s155
      %p167 = scmp.eq.s32.totalorder %s28, 1
      %p168 = por %p166, %p167
      %p170 = scmp.ne.s32.totalorder %s155, %s169
      %p171 = scmp.eq.s32.totalorder %s28, 0
      %p172 = por %p170, %p171
      %s174 = sadd.s32 %s173, 1
      %p177 = scmp.eq.s32.totalorder %s22, 1
      %p178 = scmp.ne.s32.totalorder %s173, %s175
      %p179 = scmp.eq.s32.totalorder %s22, 0
      %p180 = por %p178, %p179
      %p181 = scmp.ne.s32.totalorder %s173, %s175
      %p182 = scmp.eq.s32.totalorder %s27, 1
      %p183 = por %p181, %p182
      %p184 = scmp.ne.s32.totalorder %s175, %s176
      %p185 = scmp.eq.s32.totalorder %s27, 0
      %p186 = por %p184, %p185
      %p187 = scmp.ne.s32.totalorder %s175, %s176
      %p188 = scmp.eq.s32.totalorder %s28, 1
      %p189 = por %p187, %p188
      %p191 = scmp.ne.s32.totalorder %s176, %s190
      %p192 = scmp.eq.s32.totalorder %s28, 0
      %p193 = por %p191, %p192
      %s194 = ssub.s32 %s29, %s41
      %s195 = ssub.s32 %s30, %s37
      %s196 = sor.u32 %s194, %s195
      %p197 = scmp.eq.s32.totalorder %s196, 0
      %s199 = sadd.s32 %s198, 1
      %s200 = scalar_select %p197, %s198, %s199
      %p203 = pneg %p197
      %p204 = scmp.eq.s32.totalorder %s22, 1
      %p205 = por %p203, %p204
      %p206 = scmp.ne.s32.totalorder %s198, %s201
      %p207 = scmp.eq.s32.totalorder %s22, 0
      %p208 = por %p206, %p207
      %p209 = scmp.ne.s32.totalorder %s198, %s201
      %p210 = scmp.eq.s32.totalorder %s27, 1
      %p211 = por %p209, %p210
      %p212 = scmp.ne.s32.totalorder %s201, %s202
      %p213 = scmp.eq.s32.totalorder %s27, 0
      %p214 = por %p212, %p213
      %p215 = scmp.ne.s32.totalorder %s201, %s202
      %p216 = scmp.eq.s32.totalorder %s28, 1
      %p217 = por %p215, %p216
      %p219 = scmp.ne.s32.totalorder %s202, %s218
      %p220 = scmp.eq.s32.totalorder %s28, 0
      %p221 = por %p219, %p220
      %p222 = scmp.le.s32.totalorder 1, %s22
      %p223 = scmp.lt.s32.totalorder %s22, 3
      %p224 = pnand %p222, %p223
      %p225 = pneg %p224
      // Predicated region
      $region9: #{transformer_block.2} parent=5 // pred_check
        _
      $region10: #{transformer_block.2} parent=5 // pred_check_branch
        %227 = sbr.rel (%p224) target = $region12
      $region11: #{transformer_block.2} parent=5 // pred_region
        %s228 = ssub.s32 %s22, 1
        // Predicated region
        $region13: #{transformer_block.2} parent=11 // pred_check
          %p229 = pneg %p81
        $region14: #{transformer_block.2} parent=11 // pred_check_branch
          %231 = sbr.rel (%p229) target = $region16
        $region15: #{transformer_block.2} parent=11 // pred_region
          %233 = vsyncadd [#allocation9], 0
          %s235 = sshll.u32 %s1, 4
          %s236 = int_to_ptr.hbm [resolvable:$true] %s235
          %s237 = sshll.u32 [#allocation8], 4
          %s238 = int_to_ptr.vmem [resolvable:$true] %s237
          %240 = dma.hbm_to_vmem [thread:$0]  %s236, 16, %s238, [#allocation9]
        $region16: #{transformer_block.2} parent=11 // pred_fallthru
          _
        // Predicated region
        $region17: #{transformer_block.2} parent=11 // pred_check
          %p241 = pneg %p102
        $region18: #{transformer_block.2} parent=11 // pred_check_branch
          %243 = sbr.rel (%p241) target = $region20
        $region19: #{transformer_block.2} parent=11 // pred_region
          %245 = vsyncadd [#allocation9], 0
          %s246 = sshll.u32 %s2, 4
          %s247 = int_to_ptr.hbm [resolvable:$true] %s246
          %s248 = sshll.u32 [#allocation10], 4
          %s249 = int_to_ptr.vmem [resolvable:$true] %s248
          %254 = dma.hbm_to_vmem [thread:$0]  %s247, 256, %s249, [#allocation9], 64, 64, 4
        $region20: #{transformer_block.2} parent=11 // pred_fallthru
          _
        // Predicated region
        $region21: #{transformer_block.2} parent=11 // pred_check
          %p255 = pneg %p123
        $region22: #{transformer_block.2} parent=11 // pred_check_branch
          %257 = sbr.rel (%p255) target = $region24
        $region23: #{transformer_block.2} parent=11 // pred_region
          %259 = vsyncadd [#allocation12], 0
          %s260 = sshll.u32 %s3, 4
          %s261 = int_to_ptr.hbm [resolvable:$true] %s260
          %s262 = sshll.u32 [#allocation11], 4
          %s263 = int_to_ptr.vmem [resolvable:$true] %s262
          %268 = dma.hbm_to_vmem [thread:$0]  %s261, 256, %s263, [#allocation12], 64, 64, 4
        $region24: #{transformer_block.2} parent=11 // pred_fallthru
          _
        // Predicated region
        $region25: #{transformer_block.2} parent=11 // pred_check
          %p269 = pneg %p144
        $region26: #{transformer_block.2} parent=11 // pred_check_branch
          %271 = sbr.rel (%p269) target = $region28
        $region27: #{transformer_block.2} parent=11 // pred_region
          %273 = vsyncadd [#allocation12], 0
          %s274 = sshll.u32 %s4, 4
          %s275 = int_to_ptr.hbm [resolvable:$true] %s274
          %s276 = sshll.u32 [#allocation13], 4
          %s277 = int_to_ptr.vmem [resolvable:$true] %s276
          %282 = dma.hbm_to_vmem [thread:$0]  %s275, 256, %s277, [#allocation12], 64, 64, 4
        $region28: #{transformer_block.2} parent=11 // pred_fallthru
          _
        // Predicated region
        $region29: #{transformer_block.2} parent=11 // pred_check
          %p283 = pneg %p165
        $region30: #{transformer_block.2} parent=11 // pred_check_branch
          %285 = sbr.rel (%p283) target = $region32
        $region31: #{transformer_block.2} parent=11 // pred_region
          _
        $region32: #{transformer_block.2} parent=11 // pred_fallthru
          _
        // Predicated region
        $region33: #{transformer_block.2} parent=11 // pred_check
          %p286 = pneg %p186
        $region34: #{transformer_block.2} parent=11 // pred_check_branch
          %288 = sbr.rel (%p286) target = $region36
        $region35: #{transformer_block.2} parent=11 // pred_region
          %290 = vsyncadd [#allocation15], 0
          %s292 = sshll.u32 %s6, 4
          %s293 = int_to_ptr.hbm [resolvable:$true] %s292
          %s294 = sshll.u32 [#allocation14], 4
          %s295 = int_to_ptr.vmem [resolvable:$true] %s294
          %297 = dma.hbm_to_vmem [thread:$0]  %s293, 128, %s295, [#allocation15]
        $region36: #{transformer_block.2} parent=11 // pred_fallthru
          _
      $region12: #{transformer_block.2} parent=5 // pred_fallthru
        _
      %p298 = scmp.lt.s32.totalorder %s22, 2
      // Predicated region
      $region37: #{transformer_block.2} parent=5 // pred_check
        %p299 = pneg %p298
      $region38: #{transformer_block.2} parent=5 // pred_check_branch
        %301 = sbr.rel (%p299) target = $region40
      $region39: #{transformer_block.2} parent=5 // pred_region
        // Predicated region
        $region41: #{transformer_block.2} parent=39 // pred_check
          %p302 = pneg %p54
        $region42: #{transformer_block.2} parent=39 // pred_check_branch
          %304 = sbr.rel (%p302) target = $region44
        $region43: #{transformer_block.2} parent=39 // pred_region
          %s305 = sand.u32 %s44, 1
          %s306 = scalar_lea.sflag [#allocation6], %s305
          %s307 = sand.u32 %s44, 1
          %s308 = smul.addr %s307, 8
          %s309 = scalar_lea.vmem [#allocation5], %s308
          %311 = vsyncadd %s306, 0
          %s312 = smul.addr %s29, 8
          %s313 = scalar_lea.hbm %s0, %s312
          %s315 = sshll.u32 %s313, 4
          %s316 = int_to_ptr.hbm [resolvable:$true] %s315
          %s317 = sshll.u32 %s309, 4
          %s318 = int_to_ptr.vmem [resolvable:$true] %s317
          %320 = dma.hbm_to_vmem [thread:$0]  %s316, 128, %s318, %s306
        $region44: #{transformer_block.2} parent=39 // pred_fallthru
          _
      $region40: #{transformer_block.2} parent=5 // pred_fallthru
        _
      %p321 = scmp.le.s32.totalorder 1, %s22
      %p322 = scmp.lt.s32.totalorder %s22, 3
      %p323 = pnand %p321, %p322
      %p324 = pneg %p323
      // Predicated region
      $region45: #{transformer_block.2} parent=5 // pred_check
        _
      $region46: #{transformer_block.2} parent=5 // pred_check_branch
        %326 = sbr.rel (%p323) target = $region48
      $region47: #{transformer_block.2} parent=5 // pred_region
        %s327 = ssub.s32 %s22, 1
        %s328 = sand.u32 %s47, 1
        %s329 = scalar_lea.sflag [#allocation6], %s328
        %s330 = sand.u32 %s47, 1
        %s331 = smul.addr %s330, 8
        %s332 = scalar_lea.vmem [#allocation5], %s331
        // Predicated region
        $region49: #{transformer_block.2} parent=47 // pred_check
          %p333 = pneg %p60
        $region50: #{transformer_block.2} parent=47 // pred_check_branch
          %335 = sbr.rel (%p333) target = $region52
        $region51: #{transformer_block.2} parent=47 // pred_region
          %337 = dma.done %s329, 128
        $region52: #{transformer_block.2} parent=47 // pred_fallthru
          _
        // Predicated region
        $region53: #{transformer_block.2} parent=47 // pred_check
          %p338 = pneg %p81
        $region54: #{transformer_block.2} parent=47 // pred_check_branch
          %340 = sbr.rel (%p338) target = $region56
        $region55: #{transformer_block.2} parent=47 // pred_region
          %342 = dma.done [#allocation9], 16
        $region56: #{transformer_block.2} parent=47 // pred_fallthru
          _
        // Predicated region
        $region57: #{transformer_block.2} parent=47 // pred_check
          %p343 = pneg %p102
        $region58: #{transformer_block.2} parent=47 // pred_check_branch
          %345 = sbr.rel (%p343) target = $region60
        $region59: #{transformer_block.2} parent=47 // pred_region
          %347 = dma.done [#allocation9], 256
        $region60: #{transformer_block.2} parent=47 // pred_fallthru
          _
        // Predicated region
        $region61: #{transformer_block.2} parent=47 // pred_check
          %p348 = pneg %p123
        $region62: #{transformer_block.2} parent=47 // pred_check_branch
          %350 = sbr.rel (%p348) target = $region64
        $region63: #{transformer_block.2} parent=47 // pred_region
          %352 = dma.done [#allocation12], 256
        $region64: #{transformer_block.2} parent=47 // pred_fallthru
          _
        // Predicated region
        $region65: #{transformer_block.2} parent=47 // pred_check
          %p353 = pneg %p144
        $region66: #{transformer_block.2} parent=47 // pred_check_branch
          %355 = sbr.rel (%p353) target = $region68
        $region67: #{transformer_block.2} parent=47 // pred_region
          %357 = dma.done [#allocation12], 256
        $region68: #{transformer_block.2} parent=47 // pred_fallthru
          _
        // Predicated region
        $region69: #{transformer_block.2} parent=47 // pred_check
          %p358 = pneg %p186
        $region70: #{transformer_block.2} parent=47 // pred_check_branch
          %360 = sbr.rel (%p358) target = $region72
        $region71: #{transformer_block.2} parent=47 // pred_region
          %362 = dma.done [#allocation15], 128
        $region72: #{transformer_block.2} parent=47 // pred_fallthru
          _
        %s363 = sand.u32 %s47, 1
        %s364 = scalar_lea.sflag [#allocation6], %s363
        %s365 = sand.u32 %s47, 1
        %s366 = smul.addr %s365, 8
        %s367 = scalar_lea.vmem [#allocation5], %s366
        %p368 = pneg %p60
        %p369 = pneg %p57
        %p370 = pneg %p81
        %p371 = pneg %p78
        %p372 = pneg %p102
        %p373 = pneg %p99
        %p374 = pneg %p123
        %p375 = pneg %p120
        %p376 = pneg %p144
        %p377 = pneg %p141
        %p378 = pneg %p165
        %p379 = pneg %p162
        %p380 = pneg %p186
        %p381 = pneg %p183
        %p382 = pneg %p214
        %p383 = pneg %p211
        %s384 = sand.u32 %s201, 1
        %s385 = scalar_lea.sflag [#allocation7], %s384
        %s386 = sand.u32 %s201, 1
        %s387 = smul.addr %s386, 8
        %s388 = scalar_lea.vmem [#allocation16], %s387
        %s390 = smul.u32 %s32, 8
        %p391 = scmp.eq.s32.totalorder %s32, 0
        // Predicated region
        $region73: #{transformer_block.2} parent=47 // pred_check
          %p392 = pneg %p391
        $region74: #{transformer_block.2} parent=47 // pred_check_branch
          %394 = sbr.rel (%p392) target = $region76
        $region75: #{transformer_block.2} parent=47 // pred_region
          %v395 = vld [vmem:[%s332] sm:$0xff]
          %v396 = vld [vmem:[#allocation8] sm:$0x1]
          %v397 = vmul.f32 %v395, %v395
          %vm398 = vcmask 261120
          %v399 = vsel %vm398, %v397, 0.0
          %400 = vadd.xlane.f32.xlu0 %v399
          %v401 = vpop.xlane.xlu0 %400
          %v402 = vrcp.pop 32.0
          %v403 = vmul.f32 32.0, %v402
          %v404 = vsub.f32 1.0, %v403
          %v405 = vmul.f32 %v402, %v404
          %v406 = vadd.f32 %v402, %v405
          %vm407 = vweird.f32 %v402
          %v408 = vsel %vm407, %v402, %v406
          %v409 = vmul.f32 %v401, %v408
          %v410 = vadd.f32 %v409, 1e-05
          %v411 = vrsqrt.pop %v410
          %v412 = vmul.f32 %v411, %v410
          %v413 = vmul.f32 %v412, %v411
          %v414 = vmul.f32 0.5, %v413
          %v415 = vsub.f32 1.5, %v414
          %v416 = vmul.f32 %v411, %v415
          %vm417 = vweird.f32 %v410
          %vm418 = vweird.f32 %v411
          %vm419 = vmor %vm417, %vm418
          %v420 = vsel %vm419, %v411, %v416
          %v421 = vmul.f32 %v395, %v420
          %v423 = vperm.slane %v396, 0
          %v425 = vmul.f32 %v421, %v423
          %v426 = vpack.c.bf16 %v425, %v425
          %v427 = vld [vmem:[#allocation11] sm:$0xf]
          %v428 = vld [vmem:[#allocation11 + $0x4] sm:$0xf]
          %v429 = vld [vmem:[#allocation11 + $0x8] sm:$0xf]
          %v430 = vld [vmem:[#allocation11 + $0xc] sm:$0xf]
          %v435 = vunpack.c.l.b16 %v427
          %v436 = vunpack.c.l.b16 %v428
          %v437 = vunpack.c.l.b16 %v429
          %v438 = vunpack.c.l.b16 %v430
          %v439 = vpack.c.b16 %v436, %v435
          %v440 = vpack.c.b16 %v438, %v437
          %v444 = vsel %vm398, %v426, 0
          %446 = vmatpush.bf16.msra.mxu0 0
          %447 = vmatpush.bf16.msra.mxu0 0
          %448 = vmatpush.bf16.msra.mxu0 0
          %449 = vmatpush.bf16.msra.mxu0 0
          %450 = vmatpush.bf16.msra.mxu0 0
          %451 = vmatpush.bf16.msra.mxu0 0
          %452 = vmatpush.bf16.msra.mxu0 %v440
          %453 = vmatpush.bf16.msra.mxu0 %v439
          %454 = vmatmul.bf16.gmra.mxu0 %v444
          %v455 = vpop.f32.mrf.mxu0
          %v456 = vadd.f32 0.0, %v455
          %v457 = vpop.f32.mrf.mxu0
          %458 = vdwg.mxu0
          %v459 = vld [vmem:[%s5] sm:$0xff]
          %v460 = vmul.f32 %v456, %v459
          %v461 = vlaneseq
          %v462 = vand.u32 %v461, 127
          %v463 = vand.u32 %v462, 1
          %vm464 = vcmp.eq.s32.totalorder %v463, 0
          %vm465 = vcmask 1047808
          %466 = vrot.lane.b32.xlu0 %v456, 32
          %v467 = vpop.permute.xlu0 %466
          %v468 = vsel %vm465, %v467, %v456
          %469 = vrot.lane.b32.xlu0 %v468, 32
          %v470 = vpop.permute.xlu0 %469
          %v471 = vsel %vm465, %v470, %v456
          %v472 = vsub.f32 0.0, %v471
          %474 = vrot.lane.b32.xlu0 %v472, 127
          %v475 = vpop.permute.xlu0 %474
          %478 = vrot.lane.b32.xlu0 %v471, 97
          %v479 = vpop.permute.xlu0 %478
          %v481 = vsel %vm464, %v475, %v479
          %v482 = vld [vmem:[#allocation14] sm:$0xff]
          %v483 = vmul.f32 %v481, %v482
          %v484 = vadd.f32 %v460, %v483
          %v485 = vpack.c.bf16 %v484, %v484
          %vm486 = vcmask 257024
          %487 = vst.msk [vmem:[#allocation2] sm:$0xf] %vm486, %v485
          %v488 = vpack.c.bf16 %v456, %v456
          %490 = vrot.lane.b32.xlu0 %v488, 96
          %v491 = vpop.permute.xlu0 %490
          %493 = vst.msk [vmem:[#allocation3] sm:$0xf] %vm486, %v491
        $region76: #{transformer_block.2} parent=47 // pred_fallthru
          _
        %s494 = scalar_lea.vmem %s332, %s390 [#allocation5]
        %v495 = vld [vmem:[%s494] sm:$0xff]
        %v496 = vld [vmem:[#allocation8] sm:$0x1]
        %v497 = vmul.f32 %v495, %v495
        %vm498 = vcmask 261120
        %v499 = vsel %vm498, %v497, 0.0
        %500 = vadd.xlane.f32.xlu0 %v499
        %v501 = vpop.xlane.xlu0 %500
        %v502 = vrcp.pop 32.0
        %v503 = vmul.f32 32.0, %v502
        %v504 = vsub.f32 1.0, %v503
        %v505 = vmul.f32 %v502, %v504
        %v506 = vadd.f32 %v502, %v505
        %vm507 = vweird.f32 %v502
        %v508 = vsel %vm507, %v502, %v506
        %v509 = vmul.f32 %v501, %v508
        %v510 = vadd.f32 %v509, 1e-05
        %v511 = vrsqrt.pop %v510
        %v512 = vmul.f32 %v511, %v510
        %v513 = vmul.f32 %v512, %v511
        %v514 = vmul.f32 0.5, %v513
        %v515 = vsub.f32 1.5, %v514
        %v516 = vmul.f32 %v511, %v515
        %vm517 = vweird.f32 %v510
        %vm518 = vweird.f32 %v511
        %vm519 = vmor %vm517, %vm518
        %v520 = vsel %vm519, %v511, %v516
        %v521 = vmul.f32 %v495, %v520
        %v523 = vperm.slane %v496, 0
        %v525 = vmul.f32 %v521, %v523
        %v526 = vpack.c.bf16 %v525, %v525
        %v527 = vld [vmem:[#allocation10] sm:$0xf]
        %v528 = vld [vmem:[#allocation10 + $0x4] sm:$0xf]
        %v529 = vld [vmem:[#allocation10 + $0x8] sm:$0xf]
        %v530 = vld [vmem:[#allocation10 + $0xc] sm:$0xf]
        %v535 = vunpack.c.l.b16 %v527
        %v536 = vunpack.c.l.b16 %v528
        %v537 = vunpack.c.l.b16 %v529
        %v538 = vunpack.c.l.b16 %v530
        %v539 = vpack.c.b16 %v536, %v535
        %v540 = vpack.c.b16 %v538, %v537
        %v544 = vsel %vm498, %v526, 0
        %546 = vmatpush.bf16.msra.mxu0 0
        %547 = vmatpush.bf16.msra.mxu0 0
        %548 = vmatpush.bf16.msra.mxu0 0
        %549 = vmatpush.bf16.msra.mxu0 0
        %550 = vmatpush.bf16.msra.mxu0 0
        %551 = vmatpush.bf16.msra.mxu0 0
        %552 = vmatpush.bf16.msra.mxu0 %v540
        %553 = vmatpush.bf16.msra.mxu0 %v539
        %554 = vmatmul.bf16.gmra.mxu0 %v544
        %v555 = vpop.f32.mrf.mxu0
        %v556 = vadd.f32 0.0, %v555
        %v557 = vpop.f32.mrf.mxu0
        %558 = vdwg.mxu0
        %s559 = scalar_lea.vmem %s5, %s390
        %v560 = vld [vmem:[%s559] sm:$0xff]
        %s561 = scalar_lea.vmem [#allocation14], %s390
        %v562 = vld [vmem:[%s561] sm:$0xff]
        %v563 = vmul.f32 %v556, %v560
        %v564 = vlaneseq
        %v565 = vand.u32 %v564, 127
        %v566 = vand.u32 %v565, 1
        %vm567 = vcmp.eq.s32.totalorder %v566, 0
        %vm568 = vcmask 1047808
        %569 = vrot.lane.b32.xlu0 %v556, 32
        %v570 = vpop.permute.xlu0 %569
        %v571 = vsel %vm568, %v570, %v556
        %572 = vrot.lane.b32.xlu0 %v571, 32
        %v573 = vpop.permute.xlu0 %572
        %v574 = vsel %vm568, %v573, %v556
        %v575 = vsub.f32 0.0, %v574
        %577 = vrot.lane.b32.xlu0 %v575, 127
        %v578 = vpop.permute.xlu0 %577
        %581 = vrot.lane.b32.xlu0 %v574, 97
        %v582 = vpop.permute.xlu0 %581
        %v584 = vsel %vm567, %v578, %v582
        %v585 = vmul.f32 %v584, %v562
        %v586 = vadd.f32 %v563, %v585
        %v587 = vpack.c.bf16 %v586, %v586
        %s588 = sadd.s32 %s32, 1
        // While loop
        $region77: #{transformer_block.2} parent=47 // loop_pre_header
          _
        $region78: #{transformer_block.2} parent=47 // loop_header
          %s590 = sphi 0, %s592
          %p591 = scmp.ge.s32.totalorder %s590, %s588
          %v595 = vphi -1e+30, %v638
          %v596 = vphi 0.0, %v649
          %v597 = vphi 0.0, %v672
        $region79: #{transformer_block.2} parent=47 // loop_header_branch
          %594 = sbr.rel (%p591) target = $region83
        $region80: #{transformer_block.2} parent=47 // loop_body
          %s598 = smul.u32 %s590, 8
          %s599 = sshra.s32 %s598, 3
          %s600 = sand.u32 %s598, 7
          %s601 = smul.addr %s599, 4
          %s602 = scalar_lea.vmem [#allocation2], %s601
          %v603 = vld [vmem:[%s602] sm:$0xf]
          %s604 = smul.addr %s599, 4
          %s605 = scalar_lea.vmem [#allocation3], %s604
          %v606 = vld [vmem:[%s605] sm:$0xf]
          %vm607 = vcmask 64512
          %v609 = vsel %vm607, %v587, 0
          %v612 = vsel %vm607, %v603, 0
          %614 = vmatpush.bf16.xpose.msra.mxu0 0
          %615 = vmatpush.bf16.xpose.msra.mxu0 0
          %616 = vmatpush.bf16.xpose.msra.mxu0 0
          %617 = vmatpush.bf16.xpose.msra.mxu0 0
          %618 = vmatpush.bf16.xpose.msra.mxu0 0
          %619 = vmatpush.bf16.xpose.msra.mxu0 0
          %620 = vmatpush.bf16.xpose.msra.mxu0 0
          %621 = vmatpush.bf16.xpose.msra.mxu0 %v612
          %622 = vmatmul.bf16.gmra.mxu0 %v609
          %v623 = vpop.f32.mrf.mxu0
          %v624 = vadd.f32 0.0, %v623
          %v625 = vpop.f32.mrf.mxu0
          %626 = vdwg.mxu0
          %v627 = vstv %s598
          %v628 = vadd.s32 %v627, %v565
          %v629 = vlaneseq
          %v630 = vshrl.u32 %v629, 7
          %v631 = vstv %s390
          %v632 = vadd.s32 %v631, %v630
          %vm633 = vcmp.le.s32.totalorder %v628, %v632
          %v634 = vsel %vm633, %v624, -1e+30
          %v635 = vsel %vm607, %v634, -inf
          %636 = vmax.xlane.f32.xlu0 %v635
          %v637 = vpop.xlane.xlu0 %636
          %v638 = vmax.f32 %v595, %v637
          %v639 = vsub.f32 %v595, %v638
          %v640 = vmul.f32 %v639, 1.442695
          %v641 = vpow.pop %v640
          %v642 = vsub.f32 %v634, %v638
          %v643 = vmul.f32 %v642, 1.442695
          %v644 = vpow.pop %v643
          %v645 = vmul.f32 %v641, %v596
          %v646 = vsel %vm607, %v644, 0.0
          %647 = vadd.xlane.f32.xlu0 %v646
          %v648 = vpop.xlane.xlu0 %647
          %v649 = vadd.f32 %v645, %v648
          %v650 = vmul.f32 %v641, %v597
          %v651 = vpack.c.bf16 %v644, %v644
          %v653 = vsel %vm607, %v651, 0
          %vm655 = vcmask 1043456
          %v657 = vsel %vm655, %v606, 0
          %659 = vmatpush.bf16.msra.mxu0 0
          %660 = vmatpush.bf16.msra.mxu0 0
          %661 = vmatpush.bf16.msra.mxu0 0
          %662 = vmatpush.bf16.msra.mxu0 0
          %663 = vmatpush.bf16.msra.mxu0 0
          %664 = vmatpush.bf16.msra.mxu0 0
          %665 = vmatpush.bf16.msra.mxu0 0
          %666 = vmatpush.bf16.msra.mxu0 %v657
          %667 = vmatmul.bf16.gmra.mxu0 %v653
          %v668 = vpop.f32.mrf.mxu0
          %v669 = vadd.f32 0.0, %v668
          %v670 = vpop.f32.mrf.mxu0
          %671 = vdwg.mxu0
          %v672 = vadd.f32 %v650, %v669
        $region81: #{transformer_block.2} parent=47 // loop_footer
          %s592 = sadd.s32 %s590, 1
        $region82: #{transformer_block.2} parent=47 // loop_footer_branch
          %589 = sbr.rel target = $region78
        $region83: #{transformer_block.2} parent=47 // loop_exit
          _
        %v673 = vrcp.pop %v596
        %v674 = vmul.f32 %v597, %v673
        %v675 = vpack.c.bf16 %v674, %v674
        %vm676 = vcmask 60416
        %677 = vst.msk [vmem:[#allocation4] sm:$0xf] %vm676, %v675
        // While loop
        $region84: #{transformer_block.2} parent=47 // loop_pre_header
          _
        $region85: #{transformer_block.2} parent=47 // loop_header
          %s679 = sphi 0, %s681
          %p680 = scmp.ge.s32.totalorder %s679, %s588
          %v684 = vphi -1e+30, %v737
          %v685 = vphi 0.0, %v748
          %v686 = vphi 0.0, %v776
        $region86: #{transformer_block.2} parent=47 // loop_header_branch
          %683 = sbr.rel (%p680) target = $region90
        $region87: #{transformer_block.2} parent=47 // loop_body
          %s687 = smul.u32 %s679, 8
          %s688 = sshra.s32 %s687, 3
          %s689 = sand.u32 %s687, 7
          %s690 = smul.addr %s688, 4
          %s691 = scalar_lea.vmem [#allocation2], %s690
          %v692 = vld [vmem:[%s691] sm:$0xf]
          %s693 = smul.addr %s688, 4
          %s694 = scalar_lea.vmem [#allocation3], %s693
          %v695 = vld [vmem:[%s694] sm:$0xf]
          %v697 = vunpack.c.l.b16 %v587
          %v698 = vpack.c.b16 %v697, %v697
          %699 = vrot.lane.b32.xlu0 %v698, 120
          %v700 = vpop.permute.xlu0 %699
          %v702 = vunpack.c.l.b16 %v692
          %v703 = vpack.c.b16 %v702, %v702
          %704 = vrot.lane.b32.xlu0 %v703, 120
          %v705 = vpop.permute.xlu0 %704
          %vm706 = vcmask 64512
          %v708 = vsel %vm706, %v700, 0
          %v711 = vsel %vm706, %v705, 0
          %713 = vmatpush.bf16.xpose.msra.mxu0 0
          %714 = vmatpush.bf16.xpose.msra.mxu0 0
          %715 = vmatpush.bf16.xpose.msra.mxu0 0
          %716 = vmatpush.bf16.xpose.msra.mxu0 0
          %717 = vmatpush.bf16.xpose.msra.mxu0 0
          %718 = vmatpush.bf16.xpose.msra.mxu0 0
          %719 = vmatpush.bf16.xpose.msra.mxu0 0
          %720 = vmatpush.bf16.xpose.msra.mxu0 %v711
          %721 = vmatmul.bf16.gmra.mxu0 %v708
          %v722 = vpop.f32.mrf.mxu0
          %v723 = vadd.f32 0.0, %v722
          %v724 = vpop.f32.mrf.mxu0
          %725 = vdwg.mxu0
          %v726 = vstv %s687
          %v727 = vadd.s32 %v726, %v565
          %v728 = vlaneseq
          %v729 = vshrl.u32 %v728, 7
          %v730 = vstv %s390
          %v731 = vadd.s32 %v730, %v729
          %vm732 = vcmp.le.s32.totalorder %v727, %v731
          %v733 = vsel %vm732, %v723, -1e+30
          %v734 = vsel %vm706, %v733, -inf
          %735 = vmax.xlane.f32.xlu0 %v734
          %v736 = vpop.xlane.xlu0 %735
          %v737 = vmax.f32 %v684, %v736
          %v738 = vsub.f32 %v684, %v737
          %v739 = vmul.f32 %v738, 1.442695
          %v740 = vpow.pop %v739
          %v741 = vsub.f32 %v733, %v737
          %v742 = vmul.f32 %v741, 1.442695
          %v743 = vpow.pop %v742
          %v744 = vmul.f32 %v740, %v685
          %v745 = vsel %vm706, %v743, 0.0
          %746 = vadd.xlane.f32.xlu0 %v745
          %v747 = vpop.xlane.xlu0 %746
          %v748 = vadd.f32 %v744, %v747
          %v749 = vmul.f32 %v740, %v686
          %v750 = vpack.c.bf16 %v743, %v743
          %v752 = vunpack.c.l.b16 %v695
          %v753 = vpack.c.b16 %v752, %v752
          %754 = vrot.lane.b32.xlu0 %v753, 120
          %v755 = vpop.permute.xlu0 %754
          %v757 = vsel %vm706, %v750, 0
          %vm759 = vcmask 1043456
          %v761 = vsel %vm759, %v755, 0
          %763 = vmatpush.bf16.msra.mxu0 0
          %764 = vmatpush.bf16.msra.mxu0 0
          %765 = vmatpush.bf16.msra.mxu0 0
          %766 = vmatpush.bf16.msra.mxu0 0
          %767 = vmatpush.bf16.msra.mxu0 0
          %768 = vmatpush.bf16.msra.mxu0 0
          %769 = vmatpush.bf16.msra.mxu0 0
          %770 = vmatpush.bf16.msra.mxu0 %v761
          %771 = vmatmul.bf16.gmra.mxu0 %v757
          %v772 = vpop.f32.mrf.mxu0
          %v773 = vadd.f32 0.0, %v772
          %v774 = vpop.f32.mrf.mxu0
          %775 = vdwg.mxu0
          %v776 = vadd.f32 %v749, %v773
        $region88: #{transformer_block.2} parent=47 // loop_footer
          %s681 = sadd.s32 %s679, 1
        $region89: #{transformer_block.2} parent=47 // loop_footer_branch
          %678 = sbr.rel target = $region85
        $region90: #{transformer_block.2} parent=47 // loop_exit
          _
        %v777 = vrcp.pop %v685
        %v778 = vmul.f32 %v686, %v777
        %v779 = vpack.c.bf16 %v778, %v778
        %781 = vrot.lane.b32.xlu0 %v779, 8
        %v782 = vpop.permute.xlu0 %781
        %vm784 = vcmask 126016
        %785 = vst.msk [vmem:[#allocation4] sm:$0xf] %vm784, %v782
        // While loop
        $region91: #{transformer_block.2} parent=47 // loop_pre_header
          _
        $region92: #{transformer_block.2} parent=47 // loop_header
          %s787 = sphi 0, %s789
          %p788 = scmp.ge.s32.totalorder %s787, %s588
          %v792 = vphi -1e+30, %v845
          %v793 = vphi 0.0, %v856
          %v794 = vphi 0.0, %v884
        $region93: #{transformer_block.2} parent=47 // loop_header_branch
          %791 = sbr.rel (%p788) target = $region97
        $region94: #{transformer_block.2} parent=47 // loop_body
          %s795 = smul.u32 %s787, 8
          %s796 = sshra.s32 %s795, 3
          %s797 = sand.u32 %s795, 7
          %s798 = smul.addr %s796, 4
          %s799 = scalar_lea.vmem [#allocation2], %s798
          %v800 = vld [vmem:[%s799] sm:$0xf]
          %s801 = smul.addr %s796, 4
          %s802 = scalar_lea.vmem [#allocation3], %s801
          %v803 = vld [vmem:[%s802] sm:$0xf]
          %v805 = vunpack.c.l.b16 %v587
          %v806 = vpack.c.b16 %v805, %v805
          %807 = vrot.lane.b32.xlu0 %v806, 112
          %v808 = vpop.permute.xlu0 %807
          %v810 = vunpack.c.l.b16 %v800
          %v811 = vpack.c.b16 %v810, %v810
          %812 = vrot.lane.b32.xlu0 %v811, 112
          %v813 = vpop.permute.xlu0 %812
          %vm814 = vcmask 64512
          %v816 = vsel %vm814, %v808, 0
          %v819 = vsel %vm814, %v813, 0
          %821 = vmatpush.bf16.xpose.msra.mxu0 0
          %822 = vmatpush.bf16.xpose.msra.mxu0 0
          %823 = vmatpush.bf16.xpose.msra.mxu0 0
          %824 = vmatpush.bf16.xpose.msra.mxu0 0
          %825 = vmatpush.bf16.xpose.msra.mxu0 0
          %826 = vmatpush.bf16.xpose.msra.mxu0 0
          %827 = vmatpush.bf16.xpose.msra.mxu0 0
          %828 = vmatpush.bf16.xpose.msra.mxu0 %v819
          %829 = vmatmul.bf16.gmra.mxu0 %v816
          %v830 = vpop.f32.mrf.mxu0
          %v831 = vadd.f32 0.0, %v830
          %v832 = vpop.f32.mrf.mxu0
          %833 = vdwg.mxu0
          %v834 = vstv %s795
          %v835 = vadd.s32 %v834, %v565
          %v836 = vlaneseq
          %v837 = vshrl.u32 %v836, 7
          %v838 = vstv %s390
          %v839 = vadd.s32 %v838, %v837
          %vm840 = vcmp.le.s32.totalorder %v835, %v839
          %v841 = vsel %vm840, %v831, -1e+30
          %v842 = vsel %vm814, %v841, -inf
          %843 = vmax.xlane.f32.xlu0 %v842
          %v844 = vpop.xlane.xlu0 %843
          %v845 = vmax.f32 %v792, %v844
          %v846 = vsub.f32 %v792, %v845
          %v847 = vmul.f32 %v846, 1.442695
          %v848 = vpow.pop %v847
          %v849 = vsub.f32 %v841, %v845
          %v850 = vmul.f32 %v849, 1.442695
          %v851 = vpow.pop %v850
          %v852 = vmul.f32 %v848, %v793
          %v853 = vsel %vm814, %v851, 0.0
          %854 = vadd.xlane.f32.xlu0 %v853
          %v855 = vpop.xlane.xlu0 %854
          %v856 = vadd.f32 %v852, %v855
          %v857 = vmul.f32 %v848, %v794
          %v858 = vpack.c.bf16 %v851, %v851
          %v860 = vunpack.c.l.b16 %v803
          %v861 = vpack.c.b16 %v860, %v860
          %862 = vrot.lane.b32.xlu0 %v861, 112
          %v863 = vpop.permute.xlu0 %862
          %v865 = vsel %vm814, %v858, 0
          %vm867 = vcmask 1043456
          %v869 = vsel %vm867, %v863, 0
          %871 = vmatpush.bf16.msra.mxu0 0
          %872 = vmatpush.bf16.msra.mxu0 0
          %873 = vmatpush.bf16.msra.mxu0 0
          %874 = vmatpush.bf16.msra.mxu0 0
          %875 = vmatpush.bf16.msra.mxu0 0
          %876 = vmatpush.bf16.msra.mxu0 0
          %877 = vmatpush.bf16.msra.mxu0 0
          %878 = vmatpush.bf16.msra.mxu0 %v869
          %879 = vmatmul.bf16.gmra.mxu0 %v865
          %v880 = vpop.f32.mrf.mxu0
          %v881 = vadd.f32 0.0, %v880
          %v882 = vpop.f32.mrf.mxu0
          %883 = vdwg.mxu0
          %v884 = vadd.f32 %v857, %v881
        $region95: #{transformer_block.2} parent=47 // loop_footer
          %s789 = sadd.s32 %s787, 1
        $region96: #{transformer_block.2} parent=47 // loop_footer_branch
          %786 = sbr.rel target = $region92
        $region97: #{transformer_block.2} parent=47 // loop_exit
          _
        %v885 = vrcp.pop %v793
        %v886 = vmul.f32 %v794, %v885
        %v887 = vpack.c.bf16 %v886, %v886
        %889 = vrot.lane.b32.xlu0 %v887, 16
        %v890 = vpop.permute.xlu0 %889
        %vm892 = vcmask 191616
        %893 = vst.msk [vmem:[#allocation4] sm:$0xf] %vm892, %v890
        // While loop
        $region98: #{transformer_block.2} parent=47 // loop_pre_header
          _
        $region99: #{transformer_block.2} parent=47 // loop_header
          %s895 = sphi 0, %s897
          %p896 = scmp.ge.s32.totalorder %s895, %s588
          %v900 = vphi -1e+30, %v953
          %v901 = vphi 0.0, %v964
          %v902 = vphi 0.0, %v992
        $region100: #{transformer_block.2} parent=47 // loop_header_branch
          %899 = sbr.rel (%p896) target = $region104
        $region101: #{transformer_block.2} parent=47 // loop_body
          %s903 = smul.u32 %s895, 8
          %s904 = sshra.s32 %s903, 3
          %s905 = sand.u32 %s903, 7
          %s906 = smul.addr %s904, 4
          %s907 = scalar_lea.vmem [#allocation2], %s906
          %v908 = vld [vmem:[%s907] sm:$0xf]
          %s909 = smul.addr %s904, 4
          %s910 = scalar_lea.vmem [#allocation3], %s909
          %v911 = vld [vmem:[%s910] sm:$0xf]
          %v913 = vunpack.c.l.b16 %v587
          %v914 = vpack.c.b16 %v913, %v913
          %915 = vrot.lane.b32.xlu0 %v914, 104
          %v916 = vpop.permute.xlu0 %915
          %v918 = vunpack.c.l.b16 %v908
          %v919 = vpack.c.b16 %v918, %v918
          %920 = vrot.lane.b32.xlu0 %v919, 104
          %v921 = vpop.permute.xlu0 %920
          %vm922 = vcmask 64512
          %v924 = vsel %vm922, %v916, 0
          %v927 = vsel %vm922, %v921, 0
          %929 = vmatpush.bf16.xpose.msra.mxu0 0
          %930 = vmatpush.bf16.xpose.msra.mxu0 0
          %931 = vmatpush.bf16.xpose.msra.mxu0 0
          %932 = vmatpush.bf16.xpose.msra.mxu0 0
          %933 = vmatpush.bf16.xpose.msra.mxu0 0
          %934 = vmatpush.bf16.xpose.msra.mxu0 0
          %935 = vmatpush.bf16.xpose.msra.mxu0 0
          %936 = vmatpush.bf16.xpose.msra.mxu0 %v927
          %937 = vmatmul.bf16.gmra.mxu0 %v924
          %v938 = vpop.f32.mrf.mxu0
          %v939 = vadd.f32 0.0, %v938
          %v940 = vpop.f32.mrf.mxu0
          %941 = vdwg.mxu0
          %v942 = vstv %s903
          %v943 = vadd.s32 %v942, %v565
          %v944 = vlaneseq
          %v945 = vshrl.u32 %v944, 7
          %v946 = vstv %s390
          %v947 = vadd.s32 %v946, %v945
          %vm948 = vcmp.le.s32.totalorder %v943, %v947
          %v949 = vsel %vm948, %v939, -1e+30
          %v950 = vsel %vm922, %v949, -inf
          %951 = vmax.xlane.f32.xlu0 %v950
          %v952 = vpop.xlane.xlu0 %951
          %v953 = vmax.f32 %v900, %v952
          %v954 = vsub.f32 %v900, %v953
          %v955 = vmul.f32 %v954, 1.442695
          %v956 = vpow.pop %v955
          %v957 = vsub.f32 %v949, %v953
          %v958 = vmul.f32 %v957, 1.442695
          %v959 = vpow.pop %v958
          %v960 = vmul.f32 %v956, %v901
          %v961 = vsel %vm922, %v959, 0.0
          %962 = vadd.xlane.f32.xlu0 %v961
          %v963 = vpop.xlane.xlu0 %962
          %v964 = vadd.f32 %v960, %v963
          %v965 = vmul.f32 %v956, %v902
          %v966 = vpack.c.bf16 %v959, %v959
          %v968 = vunpack.c.l.b16 %v911
          %v969 = vpack.c.b16 %v968, %v968
          %970 = vrot.lane.b32.xlu0 %v969, 104
          %v971 = vpop.permute.xlu0 %970
          %v973 = vsel %vm922, %v966, 0
          %vm975 = vcmask 1043456
          %v977 = vsel %vm975, %v971, 0
          %979 = vmatpush.bf16.msra.mxu0 0
          %980 = vmatpush.bf16.msra.mxu0 0
          %981 = vmatpush.bf16.msra.mxu0 0
          %982 = vmatpush.bf16.msra.mxu0 0
          %983 = vmatpush.bf16.msra.mxu0 0
          %984 = vmatpush.bf16.msra.mxu0 0
          %985 = vmatpush.bf16.msra.mxu0 0
          %986 = vmatpush.bf16.msra.mxu0 %v977
          %987 = vmatmul.bf16.gmra.mxu0 %v973
          %v988 = vpop.f32.mrf.mxu0
          %v989 = vadd.f32 0.0, %v988
          %v990 = vpop.f32.mrf.mxu0
          %991 = vdwg.mxu0
          %v992 = vadd.f32 %v965, %v989
        $region102: #{transformer_block.2} parent=47 // loop_footer
          %s897 = sadd.s32 %s895, 1
        $region103: #{transformer_block.2} parent=47 // loop_footer_branch
          %894 = sbr.rel target = $region99
        $region104: #{transformer_block.2} parent=47 // loop_exit
          _
        %v993 = vrcp.pop %v901
        %v994 = vmul.f32 %v902, %v993
        %v995 = vpack.c.bf16 %v994, %v994
        %997 = vrot.lane.b32.xlu0 %v995, 24
        %v998 = vpop.permute.xlu0 %997
        %vm1000 = vcmask 257216
        %1001 = vst.msk [vmem:[#allocation4] sm:$0xf] %vm1000, %v998
        %v1002 = vld [vmem:[#allocation4] sm:$0xf]
        %v1003 = vld [vmem:[#allocation13] sm:$0xf]
        %v1004 = vld [vmem:[#allocation13 + $0x4] sm:$0xf]
        %v1005 = vld [vmem:[#allocation13 + $0x8] sm:$0xf]
        %v1006 = vld [vmem:[#allocation13 + $0xc] sm:$0xf]
        %v1011 = vunpack.c.l.b16 %v1003
        %v1012 = vunpack.c.l.b16 %v1004
        %v1013 = vunpack.c.l.b16 %v1005
        %v1014 = vunpack.c.l.b16 %v1006
        %v1015 = vpack.c.b16 %v1012, %v1011
        %v1016 = vpack.c.b16 %v1014, %v1013
        %v1020 = vsel %vm498, %v1002, 0
        %1022 = vmatpush.bf16.msra.mxu0 0
        %1023 = vmatpush.bf16.msra.mxu0 0
        %1024 = vmatpush.bf16.msra.mxu0 0
        %1025 = vmatpush.bf16.msra.mxu0 0
        %1026 = vmatpush.bf16.msra.mxu0 0
        %1027 = vmatpush.bf16.msra.mxu0 0
        %1028 = vmatpush.bf16.msra.mxu0 %v1016
        %1029 = vmatpush.bf16.msra.mxu0 %v1015
        %1030 = vmatmul.bf16.gmra.mxu0 %v1020
        %v1031 = vpop.f32.mrf.mxu0
        %v1032 = vadd.f32 0.0, %v1031
        %v1033 = vpop.f32.mrf.mxu0
        %1034 = vdwg.mxu0
        %v1035 = vadd.f32 %v495, %v1032
        %1036 = vst.msk [vmem:[%s388] sm:$0xff] %vm498, %v1035
        %s1037 = sand.u32 %s201, 1
        %s1038 = scalar_lea.sflag [#allocation7], %s1037
        %s1039 = sand.u32 %s201, 1
        %s1040 = smul.addr %s1039, 8
        %s1041 = scalar_lea.vmem [#allocation16], %s1040
        // Predicated region
        $region105: #{transformer_block.2} parent=47 // pred_check
          %p1042 = pneg %p211
        $region106: #{transformer_block.2} parent=47 // pred_check_branch
          %1044 = sbr.rel (%p1042) target = $region108
        $region107: #{transformer_block.2} parent=47 // pred_region
          %1046 = vsyncadd %s1038, 0
          %s1047 = sadd.s32 %s32, %s31
          %s1048 = smul.addr %s1047, 8
          %s1049 = scalar_lea.hbm %s7, %s1048
          %s1051 = sshll.u32 %s1041, 4
          %s1052 = int_to_ptr.vmem [resolvable:$true] %s1051
          %s1053 = sshll.u32 %s1049, 4
          %s1054 = int_to_ptr.hbm [resolvable:$true] %s1053
          %1056 = dma.vmem_to_hbm [thread:$0]  %s1052, 128, %s1054, %s1038
        $region108: #{transformer_block.2} parent=47 // pred_fallthru
          _
      $region48: #{transformer_block.2} parent=5 // pred_fallthru
        _
      %p1057 = scmp.le.s32.totalorder 2, %s22
      // Predicated region
      $region109: #{transformer_block.2} parent=5 // pred_check
        %p1058 = pneg %p1057
      $region110: #{transformer_block.2} parent=5 // pred_check_branch
        %1060 = sbr.rel (%p1058) target = $region112
      $region111: #{transformer_block.2} parent=5 // pred_region
        %s1061 = ssub.s32 %s22, 2
        // Predicated region
        $region113: #{transformer_block.2} parent=111 // pred_check
          %p1062 = pneg %p217
        $region114: #{transformer_block.2} parent=111 // pred_check_branch
          %1064 = sbr.rel (%p1062) target = $region116
        $region115: #{transformer_block.2} parent=111 // pred_region
          %s1065 = sand.u32 %s202, 1
          %s1066 = scalar_lea.sflag [#allocation7], %s1065
          %s1067 = sand.u32 %s202, 1
          %s1068 = smul.addr %s1067, 8
          %s1069 = scalar_lea.vmem [#allocation16], %s1068
          %1071 = dma.done %s1066, 128
        $region116: #{transformer_block.2} parent=111 // pred_fallthru
          _
      $region112: #{transformer_block.2} parent=5 // pred_fallthru
        _
    $region6: #{transformer_block.2} parent=1 // loop_footer
      %s26 = sadd.s32 1, %s22
    $region7: #{transformer_block.2} parent=1 // loop_footer_branch
      %21 = sbr.rel target = $region3
    $region8: #{transformer_block.2} parent=1 // loop_exit
      _
    %1072 = vsyncpa [#allocation6], 1
    %s1073 = scalar_lea.sflag [#allocation6], 1
    %1074 = vsyncpa %s1073, 1
    %1075 = vsyncpa [#allocation9], 1
    %1076 = vsyncpa [#allocation12], 1
    %1077 = vsyncpa [#allocation15], 1
    %1078 = vsyncpa [#allocation7], 1
    %s1079 = scalar_lea.sflag [#allocation7], 1
    %1080 = vsyncpa %s1079, 1

</llo_original>
